<compile_context>
chip_gen: v7x
topology: tpu7x:2x2x1
jax: 0.10.0
libtpu: 0.0.40
codegen_flags: <defaults>
</compile_context>

<pallas_src>
import functools

import jax
import jax.numpy as jnp
import numpy as np
from jax.experimental import pallas as pl
from jax.experimental.pallas import tpu as pltpu

_BN_EPS = 1e-5
_LEAKY_SLOPE = 0.01
_RESIDENT_MAX_ROWS = 1024                     # full-M resident GEMM threshold
_RESIDENT_MAX_X_BYTES = 16 * 1024 * 1024      # x block budget for resident path
_WEIGHT_BLOCK_BYTES = 8 * 1024 * 1024         # per-step weight tile budget


def _derive_vmem_limit():
    try:
        cap = pltpu.get_tpu_info().vmem_capacity_bytes
        return int(min(cap * 3 // 4, 96 * 1024 * 1024))
    except Exception:
        return 48 * 1024 * 1024    # safe on v5e / v6e / v7x


_VMEM_LIMIT = _derive_vmem_limit()


# ----------------------------------------------------------------------------
# small helpers
# ----------------------------------------------------------------------------
def _round_up(x, m):
    return (x + m - 1) // m * m


def _pad2(a, rows, cols):
    r, c = a.shape
    if r == rows and c == cols:
        return a
    return jnp.pad(a, ((0, rows - r), (0, cols - c)))


def _pad1(a, size):
    if a.shape[0] == size:
        return a
    return jnp.pad(a, ((0, size - a.shape[0]),))


def _m_tiles(m):
    m8 = _round_up(m, 8)
    if m8 <= 256:
        return m8, m8
    return _round_up(m, 256), 256


def _nk_tiles(d):
    # Prefer multiples of 256 over 384 (v6e/v7x MXU is 2x256x256); keep 384 ahead
    # of 128 so 384-divisible dims do not explode into tiny K steps.
    dp = _round_up(d, 128)
    for t in (512, 256, 384, 128):
        if dp % t == 0:
            return dp, t
    return dp, 128


def _resident_tiles(k, n, itemsize):
    """Tile choice for the full-M resident GEMMs (weight-DMA bound)."""
    k_pad = _round_up(k, 128)
    n_pad = _round_up(n, 128)
    tn = n_pad
    if n_pad > 128:
        for t in (512, 256, 128):
            if n_pad % t == 0 and n_pad // t >= 2:   # >=2 N tiles -> megacore
                tn = t
                break
    if k_pad * tn * itemsize <= _WEIGHT_BLOCK_BYTES:
        tk = k_pad                                   # single K step
    else:
        _, tk = _nk_tiles(k)
    return k_pad, tk, n_pad, tn


def _apply_act(v, act):
    if act == "relu":
        return jnp.maximum(v, 0.0)
    if act == "leaky":
        return jnp.where(v >= 0.0, v, _LEAKY_SLOPE * v)
    if act == "sigmoid":
        return 1.0 / (1.0 + jnp.exp(-v))
    return v


def _full_spec(shape):
    nd = len(shape)
    return pl.BlockSpec(tuple(shape), lambda i, _nd=nd: (0,) * _nd)


# ----------------------------------------------------------------------------
# Pallas kernels
# ----------------------------------------------------------------------------
def _make_bias_act_kernel(act):
    """out = act(x @ w + bias); grid = (N tiles, K steps), full M resident."""

    def kernel(x_ref, w_ref, b_ref, o_ref, acc_ref):
        kk = pl.program_id(1)

        @pl.when(kk == 0)
        def _():
            acc_ref[...] = jnp.zeros_like(acc_ref)

        acc_ref[...] += jnp.dot(x_ref[...], w_ref[...],
                                preferred_element_type=jnp.float32)

        @pl.when(kk == pl.num_programs(1) - 1)
        def _():
            o_ref[...] = _apply_act(acc_ref[...] + b_ref[...], act).astype(o_ref.dtype)

    return kernel


def _make_bias_act_kernel_mnk(act):
    """out = act(x @ w + bias); tiled (M, N, K) grid fallback for large M."""

    def kernel(x_ref, w_ref, b_ref, o_ref, acc_ref):
        kk = pl.program_id(2)

        @pl.when(kk == 0)
        def _():
            acc_ref[...] = jnp.zeros_like(acc_ref)

        acc_ref[...] += jnp.dot(x_ref[...], w_ref[...],
                                preferred_element_type=jnp.float32)

        @pl.when(kk == pl.num_programs(2) - 1)
        def _():
            o_ref[...] = _apply_act(acc_ref[...] + b_ref[...], act).astype(o_ref.dtype)

    return kernel


def _make_bn_resident_kernel(act, with_res, m_true, m_pad):
    """Fused GEMM + training-mode BN + optional residual + act.

    Grid = (N tiles ["parallel"], K steps ["arbitrary"]); full M resident.
    """
    inv_m = 1.0 / float(m_true)
    exact_rows = (m_pad == m_true)

    def kernel(x_ref, w_ref, g_ref, b_ref, *rest):
        if with_res:
            r_ref, o_ref, acc_ref = rest
        else:
            o_ref, acc_ref = rest
        kk = pl.program_id(1)

        @pl.when(kk == 0)
        def _():
            acc_ref[...] = jnp.zeros_like(acc_ref)

        acc_ref[...] += jnp.dot(x_ref[...], w_ref[...],
                                preferred_element_type=jnp.float32)

        @pl.when(kk == pl.num_programs(1) - 1)
        def _():
            acc = acc_ref[...]
            mean = jnp.sum(acc, axis=0, keepdims=True) * inv_m
            if exact_rows:
                d = acc - mean
                var = jnp.sum(d * d, axis=0, keepdims=True) * inv_m
                y = d * jax.lax.rsqrt(var + _BN_EPS) * g_ref[...] + b_ref[...]
            else:
                var = jnp.maximum(
                    jnp.sum(acc * acc, axis=0, keepdims=True) * inv_m - mean * mean, 0.0)
                y = (acc - mean) * jax.lax.rsqrt(var + _BN_EPS) * g_ref[...] + b_ref[...]
            if with_res:
                y = y + r_ref[...].astype(jnp.float32)
            o_ref[...] = _apply_act(y, act).astype(o_ref.dtype)

    return kernel


def _stats_gemm_kernel(x_ref, w_ref, y_ref, st_ref, acc_ref):
    """Tiled GEMM writing raw output + per-M-tile column sum / sum-of-squares."""
    kk = pl.program_id(2)

    @pl.when(kk == 0)
    def _():
        acc_ref[...] = jnp.zeros_like(acc_ref)

    acc_ref[...] += jnp.dot(x_ref[...], w_ref[...],
                            preferred_element_type=jnp.float32)

    @pl.when(kk == pl.num_programs(2) - 1)
    def _():
        acc = acc_ref[...]
        y_ref[...] = acc
        s1 = jnp.sum(acc, axis=0, keepdims=True)
        s2 = jnp.sum(acc * acc, axis=0, keepdims=True)
        rows = jax.lax.broadcasted_iota(jnp.int32, st_ref.shape, 0)
        st_ref[...] = jnp.where(rows == 0, s1, jnp.where(rows == 1, s2, 0.0))


def _make_scale_act_kernel(act, with_res):
    """out = act(y * scale + shift (+ residual)) — BN finalize epilogue."""

    def kernel(y_ref, s_ref, t_ref, *rest):
        if with_res:
            r_ref, o_ref = rest
        else:
            (o_ref,) = rest
        v = y_ref[...] * s_ref[...] + t_ref[...]
        if with_res:
            v = v + rest[0][...].astype(jnp.float32)
        o_ref[...] = _apply_act(v, act).astype(o_ref.dtype)

    return kernel


def _make_fused_block_kernel(m, p_pad, has_ds):
    """Whole stride-1 bottleneck in one kernel: conv1/conv2(3x3)/conv3 + BNs +
    optional (stride-1) downsample + residual + ReLU. The 3x3 conv is expressed
    as 9 (selection-matrix @ y1) @ W_tap matmuls so y1 never leaves VMEM."""
    inv_m = 1.0 / float(m)

    def bn_cols(acc, g, b):
        mean = jnp.sum(acc, axis=0, keepdims=True) * inv_m
        d = acc - mean
        var = jnp.sum(d * d, axis=0, keepdims=True) * inv_m
        return d * jax.lax.rsqrt(var + _BN_EPS) * g + b

    def kernel(x_ref, s_ref, w1_ref, g1_ref, b1_ref,
               w2_ref, g2_ref, b2_ref, w3_ref, g3_ref, b3_ref, *rest):
        if has_ds:
            wd_ref, gd_ref, bd_ref, o_ref, y1_ref, acc2_ref = rest
        else:
            o_ref, y1_ref, acc2_ref = rest

        # conv1 (1x1) + BN + ReLU   (kept in VMEM scratch)
        a1 = jnp.dot(x_ref[...], w1_ref[...], preferred_element_type=jnp.float32)
        y1_ref[...] = jnp.maximum(bn_cols(a1, g1_ref[...], b1_ref[...]),
                                  0.0).astype(jnp.bfloat16)

        # conv2 (3x3, stride 1, pad 1) as 9 selection + tap matmuls
        acc2_ref[...] = jnp.zeros_like(acc2_ref)
        for t in range(9):
            sel = jnp.dot(s_ref[t], y1_ref[...],
                          preferred_element_type=jnp.float32)
            acc2_ref[...] += jnp.dot(sel.astype(jnp.bfloat16), w2_ref[t],
                                     preferred_element_type=jnp.float32)
        y2 = jnp.maximum(bn_cols(acc2_ref[...], g2_ref[...], b2_ref[...]),
                         0.0).astype(jnp.bfloat16)

        # conv3 (1x1) + BN
        a3 = jnp.dot(y2, w3_ref[...], preferred_element_type=jnp.float32)
        y3 = bn_cols(a3, g3_ref[...], b3_ref[...])

        # residual (identity, or stride-1 downsample conv + BN)
        if has_ds:
            ad = jnp.dot(x_ref[...], wd_ref[...],
                         preferred_element_type=jnp.float32)
            res = bn_cols(ad, gd_ref[...], bd_ref[...])
        else:
            res = x_ref[...].astype(jnp.float32)

        o_ref[...] = jnp.maximum(y3 + res, 0.0).astype(o_ref.dtype)

    return kernel


def _maxpool_kernel(x_ref, o_ref):
    """3x3 / stride-2 / pad-1 max-pool on an even/odd-phase packed input block.

    x_ref: (1, Ho+1, 2, Wo+1, 2*C)   [-inf padded]   o_ref: (1, Ho, Wo, C)
    """
    ho = o_ref.shape[1]
    wo = o_ref.shape[2]
    c = o_ref.shape[3]
    x = x_ref[0].astype(jnp.float32)           # (Ho+1, 2, Wo+1, 2C)
    er = x[:, 0]                                # even input rows
    od = x[:, 1]                                # odd input rows
    v = jnp.maximum(jnp.maximum(er[:ho], od[:ho]), er[1:ho + 1])   # (Ho, Wo+1, 2C)
    ec = v[:, :, :c]                            # even input cols
    oc = v[:, :, c:]                            # odd input cols
    out = jnp.maximum(jnp.maximum(ec[:, :wo], oc[:, :wo]), ec[:, 1:wo + 1])
    o_ref[0] = out.astype(o_ref.dtype)


def _att_pool_kernel(a_ref, x_ref, o_ref):
    """Fused attention-weighted concat + global average pool (per batch elem).

    a_ref: (1, A, S) attention, x_ref: (1, S, C), o_ref: (1, A, C)
    o[b, i, c] = mean_s( att_i[b, s] * x[b, s, c] )  — one MXU matmul.
    """
    s = x_ref.shape[1]
    a = a_ref[0].astype(jnp.float32)            # (A, S)
    xv = x_ref[0].astype(jnp.float32)           # (S, C)
    o_ref[0] = (jnp.dot(a, xv, preferred_element_type=jnp.float32)
                * (1.0 / s)).astype(o_ref.dtype)


# ----------------------------------------------------------------------------
# GEMM wrappers (built inside jit traces, shapes static)
# ----------------------------------------------------------------------------
def _affine_resident(x, w, bias, act, out_dtype, cdt):
    m, k = x.shape
    n = w.shape[1]
    m_pad = _round_up(m, 8)
    isz = jnp.dtype(cdt).itemsize
    k_pad, tk, n_pad, tn = _resident_tiles(k, n, isz)
    xb = _pad2(x, m_pad, k_pad).astype(cdt)
    wb = _pad2(w, k_pad, n_pad).astype(cdt)
    bb = _pad1(bias.astype(jnp.float32), n_pad).reshape(1, n_pad)
    grid = (n_pad // tn, k_pad // tk)
    out = pl.pallas_call(
        _make_bias_act_kernel(act),
        out_shape=jax.ShapeDtypeStruct((m_pad, n_pad), out_dtype),
        grid_spec=pltpu.PrefetchScalarGridSpec(
            num_scalar_prefetch=0, grid=grid,
            in_specs=[pl.BlockSpec((m_pad, tk), lambda j, kk: (0, kk)),
                      pl.BlockSpec((tk, tn), lambda j, kk: (kk, j)),
                      pl.BlockSpec((1, tn), lambda j, kk: (0, j))],
            out_specs=pl.BlockSpec((m_pad, tn), lambda j, kk: (0, j)),
            scratch_shapes=[pltpu.VMEM((m_pad, tn), jnp.float32)]),
        compiler_params=pltpu.CompilerParams(
            dimension_semantics=("parallel", "arbitrary"),
            vmem_limit_bytes=_VMEM_LIMIT),
    )(xb, wb, bb)
    if m_pad != m or n_pad != n:
        out = out[:m, :n]
    return out


def _affine_tiled(x, w, bias, act, out_dtype, cdt):
    m, k = x.shape
    n = w.shape[1]
    m_pad, tm = _m_tiles(m)
    k_pad, tk = _nk_tiles(k)
    n_pad, tn = _nk_tiles(n)
    xb = _pad2(x, m_pad, k_pad).astype(cdt)
    wb = _pad2(w, k_pad, n_pad).astype(cdt)
    bb = _pad1(bias.astype(jnp.float32), n_pad).reshape(1, n_pad)
    grid = (m_pad // tm, n_pad // tn, k_pad // tk)
    out = pl.pallas_call(
        _make_bias_act_kernel_mnk(act),
        out_shape=jax.ShapeDtypeStruct((m_pad, n_pad), out_dtype),
        grid_spec=pltpu.PrefetchScalarGridSpec(
            num_scalar_prefetch=0, grid=grid,
            in_specs=[pl.BlockSpec((tm, tk), lambda i, j, kk: (i, kk)),
                      pl.BlockSpec((tk, tn), lambda i, j, kk: (kk, j)),
                      pl.BlockSpec((1, tn), lambda i, j, kk: (0, j))],
            out_specs=pl.BlockSpec((tm, tn), lambda i, j, kk: (i, j)),
            scratch_shapes=[pltpu.VMEM((tm, tn), jnp.float32)]),
        compiler_params=pltpu.CompilerParams(
            dimension_semantics=("parallel", "parallel", "arbitrary"),
            vmem_limit_bytes=_VMEM_LIMIT),
    )(xb, wb, bb)
    if m_pad != m or n_pad != n:
        out = out[:m, :n]
    return out


def _affine_gemm(x, w, bias, act, out_dtype=jnp.float32, cdt=jnp.bfloat16):
    m, k = x.shape
    m_pad = _round_up(m, 8)
    k_pad = _round_up(k, 128)
    if m_pad <= _RESIDENT_MAX_ROWS and m_pad * k_pad * jnp.dtype(cdt).itemsize \
            <= _RESIDENT_MAX_X_BYTES:
        return _affine_resident(x, w, bias, act, out_dtype, cdt)
    return _affine_tiled(x, w, bias, act, out_dtype, cdt)


def _bn_gemm_resident(x, w, gamma, beta, act, residual, keep_pad=False):
    m, k = x.shape
    n = w.shape[1]
    m_pad = _round_up(m, 8)
    k_pad, tk, n_pad, tn = _resident_tiles(k, n, 2)
    xb = _pad2(x, m_pad, k_pad).astype(jnp.bfloat16)
    wb = _pad2(w, k_pad, n_pad).astype(jnp.bfloat16)
    gb = _pad1(gamma.astype(jnp.float32), n_pad).reshape(1, n_pad)
    bb = _pad1(beta.astype(jnp.float32), n_pad).reshape(1, n_pad)
    inputs = [xb, wb, gb, bb]
    in_specs = [pl.BlockSpec((m_pad, tk), lambda j, kk: (0, kk)),
                pl.BlockSpec((tk, tn), lambda j, kk: (kk, j)),
                pl.BlockSpec((1, tn), lambda j, kk: (0, j)),
                pl.BlockSpec((1, tn), lambda j, kk: (0, j))]
    if residual is not None:
        inputs.append(_pad2(residual, m_pad, n_pad))
        in_specs.append(pl.BlockSpec((m_pad, tn), lambda j, kk: (0, j)))
    grid = (n_pad // tn, k_pad // tk)
    out = pl.pallas_call(
        _make_bn_resident_kernel(act, residual is not None, m, m_pad),
        out_shape=jax.ShapeDtypeStruct((m_pad, n_pad), jnp.bfloat16),
        grid_spec=pltpu.PrefetchScalarGridSpec(
            num_scalar_prefetch=0, grid=grid,
            in_specs=in_specs,
            out_specs=pl.BlockSpec((m_pad, tn), lambda j, kk: (0, j)),
            scratch_shapes=[pltpu.VMEM((m_pad, tn), jnp.float32)]),
        compiler_params=pltpu.CompilerParams(
            dimension_semantics=("parallel", "arbitrary"),
            vmem_limit_bytes=_VMEM_LIMIT),
    )(*inputs)
    if keep_pad:
        return out[:m, :] if m_pad != m else out
    if m_pad != m or n_pad != n:
        out = out[:m, :n]
    return out


def _bn_gemm_tiled(x, w, gamma, beta, act, residual, keep_pad=False):
    m, k = x.shape
    n = w.shape[1]
    m_pad, tm = _m_tiles(m)
    k_pad, tk = _nk_tiles(k)
    n_pad, tn = _nk_tiles(n)
    xb = _pad2(x, m_pad, k_pad).astype(jnp.bfloat16)
    wb = _pad2(w, k_pad, n_pad).astype(jnp.bfloat16)
    gm = m_pad // tm
    grid = (gm, n_pad // tn, k_pad // tk)
    y, stats = pl.pallas_call(
        _stats_gemm_kernel,
        out_shape=(jax.ShapeDtypeStruct((m_pad, n_pad), jnp.float32),
                   jax.ShapeDtypeStruct((gm * 8, n_pad), jnp.float32)),
        grid_spec=pltpu.PrefetchScalarGridSpec(
            num_scalar_prefetch=0, grid=grid,
            in_specs=[pl.BlockSpec((tm, tk), lambda i, j, kk: (i, kk)),
                      pl.BlockSpec((tk, tn), lambda i, j, kk: (kk, j))],
            out_specs=[pl.BlockSpec((tm, tn), lambda i, j, kk: (i, j)),
                       pl.BlockSpec((8, tn), lambda i, j, kk: (i, j))],
            scratch_shapes=[pltpu.VMEM((tm, tn), jnp.float32)]),
        compiler_params=pltpu.CompilerParams(
            dimension_semantics=("parallel", "parallel", "arbitrary"),
            vmem_limit_bytes=_VMEM_LIMIT),
    )(xb, wb)

    st = stats.reshape(gm, 8, n_pad)
    colsum = jnp.sum(st[:, 0, :], axis=0)
    colsq = jnp.sum(st[:, 1, :], axis=0)
    mean = colsum / m
    var = jnp.maximum(colsq / m - mean * mean, 0.0)
    gp = _pad1(gamma.astype(jnp.float32), n_pad)
    bp = _pad1(beta.astype(jnp.float32), n_pad)
    scale_v = gp * jax.lax.rsqrt(var + _BN_EPS)
    shift_v = bp - mean * scale_v
    scale = scale_v.reshape(1, n_pad)
    shift = shift_v.reshape(1, n_pad)

    inputs = [y, scale, shift]
    in_specs = [pl.BlockSpec((tm, tn), lambda i, j: (i, j)),
                pl.BlockSpec((1, tn), lambda i, j: (0, j)),
                pl.BlockSpec((1, tn), lambda i, j: (0, j))]
    if residual is not None:
        inputs.append(_pad2(residual, m_pad, n_pad))
        in_specs.append(pl.BlockSpec((tm, tn), lambda i, j: (i, j)))
    out = pl.pallas_call(
        _make_scale_act_kernel(act, residual is not None),
        out_shape=jax.ShapeDtypeStruct((m_pad, n_pad), jnp.bfloat16),
        grid_spec=pltpu.PrefetchScalarGridSpec(
            num_scalar_prefetch=0, grid=(m_pad // tm, n_pad // tn),
            in_specs=in_specs,
            out_specs=pl.BlockSpec((tm, tn), lambda i, j: (i, j))),
        compiler_params=pltpu.CompilerParams(
            dimension_semantics=("parallel", "parallel"),
            vmem_limit_bytes=_VMEM_LIMIT),
    )(*inputs)
    if keep_pad:
        return out[:m, :] if m_pad != m else out
    if m_pad != m or n_pad != n:
        out = out[:m, :n]
    return out


def _bn_gemm(x, w, gamma, beta, act, residual, keep_pad=False):
    m, k = x.shape
    m_pad = _round_up(m, 8)
    k_pad = _round_up(k, 128)
    if m_pad <= _RESIDENT_MAX_ROWS and m_pad * k_pad * 2 <= _RESIDENT_MAX_X_BYTES:
        return _bn_gemm_resident(x, w, gamma, beta, act, residual, keep_pad)
    return _bn_gemm_tiled(x, w, gamma, beta, act, residual, keep_pad)


# ----------------------------------------------------------------------------
# conv / linear / pool wrappers (im2col glue traced inside cached jits)
# ----------------------------------------------------------------------------
def _im2col(x, kh, kw, stride, pad):
    n, h, w, c = x.shape
    if kh == 1 and kw == 1 and pad == 0:
        xs = x[:, ::stride, ::stride, :]
        ho, wo = xs.shape[1], xs.shape[2]
        return xs.reshape(n * ho * wo, c), ho, wo
    xp = jnp.pad(x, ((0, 0), (pad, pad), (pad, pad), (0, 0)))
    ho = (h + 2 * pad - kh) // stride + 1
    wo = (w + 2 * pad - kw) // stride + 1
    cols = []
    for ki in range(kh):
        for kj in range(kw):
            cols.append(xp[:, ki:ki + stride * (ho - 1) + 1:stride,
                           kj:kj + stride * (wo - 1) + 1:stride, :])
    patches = jnp.concatenate(cols, axis=-1)
    return patches.reshape(n * ho * wo, kh * kw * c), ho, wo


@functools.lru_cache(maxsize=None)
def _conv_bn_fn(kh, kw, stride, pad, act, with_residual, keep_pad=False):
    def impl(x, w_gemm, gamma, beta, residual=None):
        n = x.shape[0]
        xm, ho, wo = _im2col(x, kh, kw, stride, pad)
        res_m = None
        if residual is not None:
            res_m = residual.reshape(n * ho * wo, w_gemm.shape[1])
        out = _bn_gemm(xm, w_gemm, gamma, beta, act, res_m, keep_pad)
        return out.reshape(n, ho, wo, out.shape[1])

    if with_residual:
        @jax.jit
        def f(x, w_gemm, gamma, beta, residual):
            return impl(x, w_gemm, gamma, beta, residual)
    else:
        @jax.jit
        def f(x, w_gemm, gamma, beta):
            return impl(x, w_gemm, gamma, beta)
    return f


@functools.lru_cache(maxsize=None)
def _conv_plain_fn(kh, kw, stride, pad, act):
    @jax.jit
    def f(x, w_gemm):
        n = x.shape[0]
        xm, ho, wo = _im2col(x, kh, kw, stride, pad)
        zeros = jnp.zeros((w_gemm.shape[1],), jnp.float32)
        # bf16 output: feeds another GEMM (attention 1x1)
        out = _affine_gemm(xm, w_gemm, zeros, act, jnp.bfloat16, jnp.bfloat16)
        return out.reshape(n, ho, wo, out.shape[1])
    return f


_DT = {"f32": jnp.float32, "bf16": jnp.bfloat16}


@functools.lru_cache(maxsize=None)
def _linear_fn(act, out_dt="f32", compute="bf16"):
    @jax.jit
    def f(x, w_t, b):          # w_t: (in, out)
        return _affine_gemm(x, w_t, b, act, _DT[out_dt], _DT[compute])
    return f


@functools.lru_cache(maxsize=None)
def _maxpool_fn():
    @jax.jit
    def f(x):                  # (N, H, W, C) with H, W even
        n, h, w, c = x.shape
        ho, wo = h // 2, w // 2
        xp = jnp.pad(x, ((0, 0), (1, 1), (1, 1), (0, 0)),
                     constant_values=-jnp.inf)
        xr = xp.reshape(n, ho + 1, 2, wo + 1, 2 * c)
        return pl.pallas_call(
            _maxpool_kernel,
            out_shape=jax.ShapeDtypeStruct((n, ho, wo, c), x.dtype),
            grid_spec=pltpu.PrefetchScalarGridSpec(
                num_scalar_prefetch=0, grid=(n,),
                in_specs=[pl.BlockSpec((1, ho + 1, 2, wo + 1, 2 * c),
                                       lambda b: (b, 0, 0, 0, 0))],
                out_specs=pl.BlockSpec((1, ho, wo, c), lambda b: (b, 0, 0, 0))),
            compiler_params=pltpu.CompilerParams(
                dimension_semantics=("parallel",),
                vmem_limit_bytes=_VMEM_LIMIT),
        )(xr)
    return f


@functools.lru_cache(maxsize=None)
def _att_pool_fn():
    @jax.jit
    def f(att_t, xs3):         # att_t (n, A, S), xs3 (n, S, C)
        n, a, s = att_t.shape
        c = xs3.shape[2]
        return pl.pallas_call(
            _att_pool_kernel,
            out_shape=jax.ShapeDtypeStruct((n, a, c), jnp.float32),
            grid_spec=pltpu.PrefetchScalarGridSpec(
                num_scalar_prefetch=0, grid=(n,),
                in_specs=[pl.BlockSpec((1, a, s), lambda b: (b, 0, 0)),
                          pl.BlockSpec((1, s, c), lambda b: (b, 0, 0))],
                out_specs=pl.BlockSpec((1, a, c), lambda b: (b, 0, 0))),
            compiler_params=pltpu.CompilerParams(
                dimension_semantics=("parallel",),
                vmem_limit_bytes=_VMEM_LIMIT),
        )(att_t, xs3)
    return f


# ----------------------------------------------------------------------------
# fused stride-1 bottleneck
# ----------------------------------------------------------------------------
def _shift_mats(n_img, h, w):
    """(9, M, M) 0/1 selection matrices implementing a 3x3 / stride-1 / pad-1
    spatial gather on the row-major (n, i, j) flattening."""
    m = n_img * h * w
    S = np.zeros((9, m, m), np.float32)
    idx = np.arange(m)
    nn = idx // (h * w)
    rem = idx % (h * w)
    ii = rem // w
    jj = rem % w
    for ki in range(3):
        for kj in range(3):
            di, dj = ki - 1, kj - 1
            si = ii + di
            sj = jj + dj
            valid = (si >= 0) & (si < h) & (sj >= 0) & (sj < w)
            src = nn * h * w + si * w + sj
            S[ki * 3 + kj, idx[valid], src[valid]] = 1.0
    return jnp.asarray(S, jnp.bfloat16)


@functools.lru_cache(maxsize=None)
def _fused_block_fn(n_img, h, w, cin_x, planes, has_ds):
    m = n_img * h * w
    p_pad = _round_up(planes, 128)
    c4 = planes * 4
    kp = _round_up(cin_x, 128)
    s_mats = _shift_mats(n_img, h, w)
    kern = _make_fused_block_kernel(m, p_pad, has_ds)

    def prep(x, w1, g1, b1, w2, g2, b2, w3, g3, b3, wd=None, gd=None, bd=None):
        xm = _pad2(x.reshape(m, cin_x), m, kp).astype(jnp.bfloat16)
        w1p = _pad2(w1, kp, p_pad)
        w2p = w2.reshape(9, planes, planes)
        if p_pad != planes:
            w2p = jnp.pad(w2p, ((0, 0), (0, p_pad - planes), (0, p_pad - planes)))
        w3p = _pad2(w3, p_pad, c4)

        def vec(v, size):
            return _pad1(v.astype(jnp.float32), size).reshape(1, size)

        inputs = [xm, s_mats, w1p, vec(g1, p_pad), vec(b1, p_pad),
                  w2p, vec(g2, p_pad), vec(b2, p_pad),
                  w3p, vec(g3, c4), vec(b3, c4)]
        if has_ds:
            inputs += [_pad2(wd, kp, c4), vec(gd, c4), vec(bd, c4)]
        in_specs = [_full_spec(a.shape) for a in inputs]
        out = pl.pallas_call(
            kern,
            out_shape=jax.ShapeDtypeStruct((m, c4), jnp.bfloat16),
            grid_spec=pltpu.PrefetchScalarGridSpec(
                num_scalar_prefetch=0, grid=(1,),
                in_specs=in_specs,
                out_specs=pl.BlockSpec((m, c4), lambda i: (0, 0)),
                scratch_shapes=[pltpu.VMEM((m, p_pad), jnp.bfloat16),
                                pltpu.VMEM((m, p_pad), jnp.float32)]),
            compiler_params=pltpu.CompilerParams(
                dimension_semantics=("arbitrary",),
                vmem_limit_bytes=_VMEM_LIMIT),
        )(*inputs)
        return out.reshape(n_img, h, w, c4)

    if has_ds:
        @jax.jit
        def f(x, w1, g1, b1, w2, g2, b2, w3, g3, b3, wd, gd, bd):
            return prep(x, w1, g1, b1, w2, g2, b2, w3, g3, b3, wd, gd, bd)
    else:
        @jax.jit
        def f(x, w1, g1, b1, w2, g2, b2, w3, g3, b3):
            return prep(x, w1, g1, b1, w2, g2, b2, w3, g3, b3)
    return f


_FUSED_STATE = {"enabled": True}
_FUSED_VALIDATED = set()


# ----------------------------------------------------------------------------
# deterministic parameter construction (matches module __init__ shapes)
# ----------------------------------------------------------------------------
_LAYER_PLANES = (64, 128, 256, 512)
_LAYER_BLOCKS = (3, 4, 23, 3)
_LAYER_STRIDES = (1, 2, 2, 1)


class KeyGen:
    def __init__(self, seed=0):
        self._key = jax.random.PRNGKey(seed)

    def __call__(self):
        self._key, sub = jax.random.split(self._key)
        return sub


def conv_w_torch(kg, cout, cin, kh, kw):
    # kaiming_normal_(mode='fan_out', nonlinearity='relu')
    std = (2.0 / (cout * kh * kw)) ** 0.5
    return std * jax.random.normal(kg(), (cout, cin, kh, kw), jnp.float32)


def conv_w_gemm(kg, cout, cin, kh, kw):
    w = conv_w_torch(kg, cout, cin, kh, kw)
    return jnp.transpose(w, (2, 3, 1, 0)).reshape(kh * kw * cin, cout).astype(jnp.bfloat16)


def bn_p(c):
    return jnp.ones((c,), jnp.float32), jnp.zeros((c,), jnp.float32)


def linear_p(kg, in_f, out_f):
    bound = 1.0 / (in_f ** 0.5)
    w = jax.random.uniform(kg(), (out_f, in_f), jnp.float32, -bound, bound)
    b = jax.random.uniform(kg(), (out_f,), jnp.float32, -bound, bound)
    return jnp.transpose(w).astype(jnp.bfloat16), b     # (in, out) bf16, bias f32


def make_bottleneck(kg, inplanes, planes, downsample):
    p = {"w1": conv_w_gemm(kg, planes, inplanes, 1, 1)}
    p["g1"], p["b1"] = bn_p(planes)
    p["w2"] = conv_w_gemm(kg, planes, planes, 3, 3)
    p["g2"], p["b2"] = bn_p(planes)
    p["w3"] = conv_w_gemm(kg, planes * 4, planes, 1, 1)
    p["g3"], p["b3"] = bn_p(planes * 4)
    if downsample:
        p["wd"] = conv_w_gemm(kg, planes * 4, inplanes, 1, 1)
        p["gd"], p["bd"] = bn_p(planes * 4)
    return p


def make_model_params(num_classes, sf_size, seed=0):
    kg = KeyGen(seed)
    P = {}
    P["conv1"] = conv_w_gemm(kg, 64, 3, 7, 7)
    P["bn1"] = bn_p(64)
    inplanes = 64
    for li in range(4):
        planes, blocks, stride = _LAYER_PLANES[li], _LAYER_BLOCKS[li], _LAYER_STRIDES[li]
        layer = []
        for bi in range(blocks):
            s = stride if bi == 0 else 1
            ds = bi == 0 and (s != 1 or inplanes != planes * 4)
            layer.append(make_bottleneck(kg, inplanes, planes, ds))
            inplanes = planes * 4
        P["layer%d" % (li + 1)] = layer

    feat = 2048
    cps = feat // 6                 # 341
    cps_p = _round_up(cps, 128)     # 384 (lane aligned)

    # Parent-grained Semantic Embedding
    P["pse_proj_w"] = conv_w_gemm(kg, feat, feat, 1, 1)
    P["pse_proj_bn"] = bn_p(feat)
    P["pse_sem1"] = linear_p(kg, sf_size, 1024)
    P["pse_sem2"] = linear_p(kg, 1024, feat)
    P["pse_cls"] = linear_p(kg, feat, num_classes)

    # Sub-grained Transfer Embedding (group-padded to cps_p lanes)
    w = conv_w_gemm(kg, cps, feat, 1, 1)                       # (2048, 341)
    P["ste_cps_w"] = jnp.pad(w, ((0, 0), (0, cps_p - cps)))
    P["ste_cps_g"] = jnp.ones((cps_p,), jnp.float32)
    P["ste_cps_b"] = jnp.zeros((cps_p,), jnp.float32)

    big3 = jnp.zeros((9 * cps_p, 6 * cps_p), jnp.float32)      # batched 3x3 convs
    att_w = jnp.zeros((6 * cps_p, 6), jnp.float32)             # block-diag 1x1 convs
    for i in range(6):
        w3 = conv_w_torch(kg, cps, cps, 3, 3)
        w1 = conv_w_torch(kg, 1, cps, 1, 1)
        w3g = jnp.transpose(w3, (2, 3, 1, 0))                  # (3,3,cin,cout)
        w3g = jnp.pad(w3g, ((0, 0), (0, 0), (0, cps_p - cps), (0, 0)))
        w3g = w3g.reshape(9 * cps_p, cps)
        big3 = big3.at[:, i * cps_p:i * cps_p + cps].set(w3g)
        att_w = att_w.at[i * cps_p:i * cps_p + cps, i].set(w1[0, :, 0, 0])
    P["ste_spa3_w"] = big3.astype(jnp.bfloat16)
    P["ste_att_wt"] = att_w.astype(jnp.bfloat16)
    P["ste_att_b"] = jnp.zeros((6,), jnp.float32)

    wt, b = linear_p(kg, cps * 6, feat)                        # (2046, 2048)
    wt = wt.reshape(6, cps, feat)
    wt = jnp.pad(wt, ((0, 0), (0, cps_p - cps), (0, 0))).reshape(6 * cps_p, feat)
    P["ste_proj_wt"] = wt
    P["ste_proj_b"] = b
    return P


# ----------------------------------------------------------------------------
# forward pass
# ----------------------------------------------------------------------------
def _l2norm(x, eps=1e-12):
    nrm = jnp.sqrt(jnp.sum(x * x, axis=1, keepdims=True))
    return x / jnp.maximum(nrm, eps)


def _pse_sem(P, atr):
    wt1, b1 = P["pse_sem1"]
    wt2, b2 = P["pse_sem2"]
    h = _linear_fn("leaky")(atr, wt1, b1)
    return _linear_fn("leaky")(h, wt2, b2)


def bottleneck_forward(x, p, stride):
    n_img, h, w, cin = x.shape
    planes = p["g1"].shape[0]
    has_ds = "wd" in p

    if stride == 1 and _FUSED_STATE["enabled"]:
        key = (n_img, h, w, cin, planes, has_ds)
        try:
            fn = _fused_block_fn(*key)
            if has_ds:
                out = fn(x, p["w1"], p["g1"], p["b1"], p["w2"], p["g2"], p["b2"],
                         p["w3"], p["g3"], p["b3"], p["wd"], p["gd"], p["bd"])
            else:
                out = fn(x, p["w1"], p["g1"], p["b1"], p["w2"], p["g2"], p["b2"],
                         p["w3"], p["g3"], p["b3"])
            if key not in _FUSED_VALIDATED:
                jax.block_until_ready(out)
                _FUSED_VALIDATED.add(key)
            return out
        except Exception:
            _FUSED_STATE["enabled"] = False     # fall back to per-conv path

    c1 = _conv_bn_fn(1, 1, 1, 0, "relu", False)(x, p["w1"], p["g1"], p["b1"])
    c2 = _conv_bn_fn(3, 3, stride, 1, "relu", False)(c1, p["w2"], p["g2"], p["b2"])
    if has_ds:
        res = _conv_bn_fn(1, 1, stride, 0, "none", False)(x, p["wd"], p["gd"], p["bd"])
    else:
        res = x
    # conv3 + BN3 + residual-add + ReLU fused in one epilogue
    return _conv_bn_fn(1, 1, 1, 0, "relu", True)(c2, p["w3"], p["g3"], p["b3"], res)


def model_forward(P, x_nchw, p_atr, s_atr):
    x = jnp.transpose(x_nchw, (0, 2, 3, 1)).astype(jnp.float32)   # NCHW -> NHWC
    g1, b1 = P["bn1"]
    # Stem conv keeps its 128-lane channel padding (zero-padded BN channels are
    # exact through the pool and the padded-K 1x1 convs of layer1's first block).
    x = _conv_bn_fn(7, 7, 2, 3, "relu", False, True)(x, P["conv1"], g1, b1)
    x = _maxpool_fn()(x)                                          # 3x3 / s2 / p1

    for li in range(4):
        stride = _LAYER_STRIDES[li]
        for bi, blk in enumerate(P["layer%d" % (li + 1)]):
            s = stride if bi == 0 else 1
            x = bottleneck_forward(x, blk, s)
    last_conv = x
    n, h, w, feat = last_conv.shape
    hw = h * w

    # --- Parent-grained Semantic Embedding ---
    g, b = P["pse_proj_bn"]
    t = _conv_bn_fn(1, 1, 1, 0, "relu", False)(last_conv, P["pse_proj_w"], g, b)
    x_pse = jnp.mean(t.reshape(n, hw, feat).astype(jnp.float32), axis=1)

    sem = _pse_sem(P, p_atr)
    zeros_nc = jnp.zeros((sem.shape[0],), jnp.float32)
    # cosine-similarity / classifier logits in f32 (tiny GEMMs, avoids bf16 ties)
    logit_pse = _linear_fn("none", "f32", "f32")(
        _l2norm(x_pse), jnp.transpose(_l2norm(sem)), zeros_nc)
    wt_cls, b_cls = P["pse_cls"]
    logit_cls = _linear_fn("none", "f32", "f32")(x_pse, wt_cls, b_cls)

    # --- Sub-grained Transfer Embedding ---
    cps_p = P["ste_cps_g"].shape[0]
    xs = _conv_bn_fn(1, 1, 1, 0, "relu", False)(last_conv, P["ste_cps_w"],
                                                P["ste_cps_g"], P["ste_cps_b"])
    a = _conv_plain_fn(3, 3, 1, 1, "relu")(xs, P["ste_spa3_w"])          # 6 branches batched
    att = _linear_fn("sigmoid")(a.reshape(n * hw, 6 * cps_p),
                                P["ste_att_wt"], P["ste_att_b"])          # (n*hw, 6)
    att_t = jnp.transpose(att.reshape(n, hw, 6), (0, 2, 1))
    xg = _att_pool_fn()(att_t, xs.reshape(n, hw, cps_p)).reshape(n, 6 * cps_p)
    x_ste = _linear_fn("leaky")(xg, P["ste_proj_wt"], P["ste_proj_b"])

    sem2 = _pse_sem(P, s_atr)
    logit_ste = _linear_fn("none", "f32", "f32")(
        _l2norm(x_ste), jnp.transpose(_l2norm(sem2)), zeros_nc)

    last_conv_nchw = jnp.transpose(last_conv.astype(jnp.float32), (0, 3, 1, 2))
    return (logit_cls, logit_pse, logit_ste), last_conv_nchw


# ----------------------------------------------------------------------------
if __name__ == "__main__":
    num_classes = 10
    sf_size = 16

    params = make_model_params(num_classes, sf_size, seed=0)

    key = jax.random.PRNGKey(0)
    k1, k2, k3 = jax.random.split(key, 3)
    x = jax.random.normal(k1, (2, 3, 32, 32), jnp.float32)            # NCHW input
    p_atr = jax.random.normal(k2, (num_classes, sf_size), jnp.float32)
    s_atr = jax.random.normal(k3, (num_classes, sf_size), jnp.float32)

    (logit_cls, logit_pse, logit_ste), last_conv = model_forward(params, x, p_atr, s_atr)
    jax.block_until_ready((logit_cls, logit_pse, logit_ste, last_conv))

    assert logit_cls.shape == (2, num_classes)
    assert logit_pse.shape == (2, num_classes)
    assert logit_ste.shape == (2, num_classes)
    assert last_conv.shape == (2, 2048, 2, 2)
    for v in (logit_cls, logit_pse, logit_ste, last_conv):
        assert bool(jnp.all(jnp.isfinite(v)))
    print("KERNEL_OK")
</pallas_src>

<mosaic_0001>
module attributes {stable_mosaic.version = 11 : i64} {
  func.func @kernel(%arg0: i32, %arg1: i32, %arg2: memref<512x256xbf16, #tpu.memory_space<vmem>>, %arg3: memref<256x128xbf16, #tpu.memory_space<vmem>>, %arg4: memref<1x128xf32, #tpu.memory_space<vmem>>, %arg5: memref<1x128xf32, #tpu.memory_space<vmem>>, %arg6: memref<512x128xbf16, #tpu.memory_space<vmem>>, %arg7: memref<512x128xf32, #tpu.memory_space<vmem>>) attributes {dimension_semantics = [#tpu.dimension_semantics<parallel>, #tpu.dimension_semantics<arbitrary>], iteration_bounds = array<i64: 1, 1>, scalar_prefetch = 0 : i64, scratch_operands = 1 : i64, tpu.core_type = #tpu.core_type<tc>, window_params = [{transform_indices = @transform_0, window_bounds = array<i64: 512, 256>}, {transform_indices = @transform_1, window_bounds = array<i64: 256, 128>}, {transform_indices = @transform_2, window_bounds = array<i64: 1, 128>}, {transform_indices = @transform_3, window_bounds = array<i64: 1, 128>}, {transform_indices = @transform_4, window_bounds = array<i64: 512, 128>}]} {
    %c0_i32 = arith.constant 0 : i32
    %0 = arith.cmpi eq, %arg1, %c0_i32 : i32
    %1 = arith.extui %0 : i1 to i32
    %c0_i32_0 = arith.constant 0 : i32
    %2 = arith.cmpi ne, %1, %c0_i32_0 : i32
    scf.if %2 {
      %cst_10 = arith.constant 0.000000e+00 : f32
      %12 = vector.broadcast %cst_10 : f32 to vector<512x128xf32>
      %c0_11 = arith.constant 0 : index
      %c0_12 = arith.constant 0 : index
      %13 = vector.load %arg7[%c0_11, %c0_12] : memref<512x128xf32, #tpu.memory_space<vmem>>, vector<512x128xf32>
      tpu.vector_store %arg7[%c0_11, %c0_12], %12 {strides = array<i32>} : memref<512x128xf32, #tpu.memory_space<vmem>>, vector<512x128xf32>,
    } else {
    }
    %c0 = arith.constant 0 : index
    %c0_1 = arith.constant 0 : index
    %3 = vector.load %arg7[%c0, %c0_1] : memref<512x128xf32, #tpu.memory_space<vmem>>, vector<512x128xf32>
    %c0_2 = arith.constant 0 : index
    %c0_3 = arith.constant 0 : index
    %4 = vector.load %arg2[%c0_2, %c0_3] : memref<512x256xbf16, #tpu.memory_space<vmem>>, vector<512x256xbf16>
    %c0_4 = arith.constant 0 : index
    %c0_5 = arith.constant 0 : index
    %5 = vector.load %arg3[%c0_4, %c0_5] : memref<256x128xbf16, #tpu.memory_space<vmem>>, vector<256x128xbf16>
    %cst = arith.constant dense<0.000000e+00> : vector<512x128xf32>
    %6 = tpu.matmul %4, %5, %cst {dimension_numbers = #tpu.dot_dimension_numbers<[1], [0], [0], [1], [0, 0, 1, 1], [], []>} : vector<512x256xbf16>, vector<256x128xbf16>, vector<512x128xf32> -> vector<512x128xf32>
    %7 = arith.addf %3, %6 : vector<512x128xf32>
    %c0_6 = arith.constant 0 : index
    %c0_7 = arith.constant 0 : index
    %8 = vector.load %arg7[%c0_6, %c0_7] : memref<512x128xf32, #tpu.memory_space<vmem>>, vector<512x128xf32>
    tpu.vector_store %arg7[%c0_6, %c0_7], %7 {strides = array<i32>} : memref<512x128xf32, #tpu.memory_space<vmem>>, vector<512x128xf32>,
    %c0_i32_8 = arith.constant 0 : i32
    %9 = arith.cmpi eq, %arg1, %c0_i32_8 : i32
    %10 = arith.extui %9 : i1 to i32
    %c0_i32_9 = arith.constant 0 : i32
    %11 = arith.cmpi ne, %10, %c0_i32_9 : i32
    scf.if %11 {
      %c0_10 = arith.constant 0 : index
      %c0_11 = arith.constant 0 : index
      %12 = vector.load %arg7[%c0_10, %c0_11] : memref<512x128xf32, #tpu.memory_space<vmem>>, vector<512x128xf32>
      %cst_12 = arith.constant dense<0.000000e+00> : vector<128xf32>
      %13 = vector.multi_reduction <add>, %12, %cst_12 [0] : vector<512x128xf32> to vector<128xf32>
      %14 = vector.shape_cast %13 : vector<128xf32> to vector<1x128xf32>
      %cst_13 = arith.constant 0.001953125 : f32
      %15 = vector.broadcast %cst_13 : f32 to vector<1x128xf32>
      %16 = arith.mulf %14, %15 : vector<1x128xf32>
      %17 = vector.broadcast %16 : vector<1x128xf32> to vector<512x128xf32>
      %18 = arith.subf %12, %17 : vector<512x128xf32>
      %19 = arith.mulf %18, %18 : vector<512x128xf32>
      %cst_14 = arith.constant dense<0.000000e+00> : vector<128xf32>
      %20 = vector.multi_reduction <add>, %19, %cst_14 [0] : vector<512x128xf32> to vector<128xf32>
      %21 = vector.shape_cast %20 : vector<128xf32> to vector<1x128xf32>
      %cst_15 = arith.constant 0.001953125 : f32
      %22 = vector.broadcast %cst_15 : f32 to vector<1x128xf32>
      %23 = arith.mulf %21, %22 : vector<1x128xf32>
      %cst_16 = arith.constant 9.99999974E-6 : f32
      %24 = vector.broadcast %cst_16 : f32 to vector<1x128xf32>
      %25 = arith.addf %23, %24 : vector<1x128xf32>
      %26 = math.rsqrt %25 : vector<1x128xf32>
      %27 = vector.broadcast %26 : vector<1x128xf32> to vector<512x128xf32>
      %28 = arith.mulf %18, %27 : vector<512x128xf32>
      %c0_17 = arith.constant 0 : index
      %c0_18 = arith.constant 0 : index
      %29 = vector.load %arg4[%c0_17, %c0_18] : memref<1x128xf32, #tpu.memory_space<vmem>>, vector<1x128xf32>
      %30 = vector.broadcast %29 : vector<1x128xf32> to vector<512x128xf32>
      %31 = arith.mulf %28, %30 : vector<512x128xf32>
      %c0_19 = arith.constant 0 : index
      %c0_20 = arith.constant 0 : index
      %32 = vector.load %arg5[%c0_19, %c0_20] : memref<1x128xf32, #tpu.memory_space<vmem>>, vector<1x128xf32>
      %33 = vector.broadcast %32 : vector<1x128xf32> to vector<512x128xf32>
      %34 = arith.addf %31, %33 : vector<512x128xf32>
      %cst_21 = arith.constant 0.000000e+00 : f32
      %35 = vector.broadcast %cst_21 : f32 to vector<512x128xf32>
      %36 = arith.maximumf %34, %35 : vector<512x128xf32>
      %37 = arith.truncf %36 : vector<512x128xf32> to vector<512x128xbf16>
      %c0_22 = arith.constant 0 : index
      %c0_23 = arith.constant 0 : index
      %38 = vector.load %arg6[%c0_22, %c0_23] : memref<512x128xbf16, #tpu.memory_space<vmem>>, vector<512x128xbf16>
      tpu.vector_store %arg6[%c0_22, %c0_23], %37 {strides = array<i32>} : memref<512x128xbf16, #tpu.memory_space<vmem>>, vector<512x128xbf16>,
    } else {
    }
    return
  }
  func.func @transform_0(%arg0: i32, %arg1: i32) -> (i32, i32) {
    %c0_i32 = arith.constant 0 : i32
    %c0_i32_0 = arith.constant 0 : i32
    return %c0_i32, %arg1 : i32, i32
  }
  func.func @transform_1(%arg0: i32, %arg1: i32) -> (i32, i32) {
    %c0_i32 = arith.constant 0 : i32
    return %arg1, %arg0 : i32, i32
  }
  func.func @transform_2(%arg0: i32, %arg1: i32) -> (i32, i32) {
    %c0_i32 = arith.constant 0 : i32
    %c0_i32_0 = arith.constant 0 : i32
    return %c0_i32, %arg0 : i32, i32
  }
  func.func @transform_3(%arg0: i32, %arg1: i32) -> (i32, i32) {
    %c0_i32 = arith.constant 0 : i32
    %c0_i32_0 = arith.constant 0 : i32
    return %c0_i32, %arg0 : i32, i32
  }
  func.func @transform_4(%arg0: i32, %arg1: i32) -> (i32, i32) {
    %c0_i32 = arith.constant 0 : i32
    %c0_i32_0 = arith.constant 0 : i32
    return %c0_i32, %arg0 : i32, i32
  }
}

</mosaic_0001>

<llo_original>
// kernel: f.1
$region0: #{f.1}
  #allocation0 [shape = 'u32[]', space=smem, size = 0x4, offset = 0x4, fixed_abs, tag = 'smem constant byte address 0x4 - core index']
  #allocation1 [shape = 'u32[144,128]{1,0:T(1,128)}', space=vmem, size = 0x12000, scoped, tag = 'internal scratch']
  #allocation2 [shape = 'f32[512,128]{1,0:T(8,128)}', space=vmem, size = 0x40000, scoped, tag = 'scratch operand']
  %s0 = inlined_call_operand.vmem [shape: bf16[512,256], index: 0, kind: input, shape index: {}]
  %s1 = inlined_call_operand.vmem [shape: bf16[256,128], index: 1, kind: input, shape index: {}]
  %s2 = inlined_call_operand.vmem [shape: f32[1,128], index: 2, kind: input, shape index: {}]
  %s3 = inlined_call_operand.vmem [shape: f32[1,128], index: 3, kind: input, shape index: {}]
  %s4 = inlined_call_operand.hbm [shape: bf16[512,128], index: 4, kind: output, shape index: {}]
  %s5 = sld [smem:[#allocation0]]
  $region34: #{f.1} parent=0
    _
  %s7 = ssub.s32 1, %s5
  %s8 = scalar_select 0, %s7, %s5
  $region1: #{f.1} parent=0
    #allocation3 [shape = 'u8[131072]{0}', space=vmem, size = 0x20000, scoped, tag = 'output window, operand 0, single buffered']
    #allocation4 [shape = 's32[1]{0}', space=sflag, size = 0x4, scoped, tag = 'scoped memory for f.1']
    %9 = vsyncpa [#allocation4], 0
    // Predicated region
    $region2: #{f.1} parent=1 // pred_check
      _
    $region3: #{f.1} parent=1 // pred_check_branch
      %11 = sbr.rel (0) target = $region5
    $region4: #{f.1} parent=1 // pred_region
      _
    $region5: #{f.1} parent=1 // pred_fallthru
      _
    // Predicated region
    $region6: #{f.1} parent=1 // pred_check
      _
    $region7: #{f.1} parent=1 // pred_check_branch
      %13 = sbr.rel (0) target = $region9
    $region8: #{f.1} parent=1 // pred_region
      _
    $region9: #{f.1} parent=1 // pred_fallthru
      _
    // Predicated region
    $region10: #{f.1} parent=1 // pred_check
      _
    $region11: #{f.1} parent=1 // pred_check_branch
      %15 = sbr.rel (0) target = $region13
    $region12: #{f.1} parent=1 // pred_region
      _
    $region13: #{f.1} parent=1 // pred_fallthru
      _
    // Predicated region
    $region14: #{f.1} parent=1 // pred_check
      _
    $region15: #{f.1} parent=1 // pred_check_branch
      %17 = sbr.rel (0) target = $region17
    $region16: #{f.1} parent=1 // pred_region
      _
    $region17: #{f.1} parent=1 // pred_fallthru
      _
    %p19 = scmp.eq.s32.totalorder 0, 0
    // Predicated region
    $region18: #{f.1} parent=1 // pred_check
      %p20 = pneg %p19
    $region19: #{f.1} parent=1 // pred_check_branch
      %22 = sbr.rel (%p20) target = $region21
    $region20: #{f.1} parent=1 // pred_region
      %23 = vst [vmem:[#allocation2] sm:$0xff] 0.0
      %24 = vst [vmem:[#allocation2 + $0x8] sm:$0xff] 0.0
      %25 = vst [vmem:[#allocation2 + $0x10] sm:$0xff] 0.0
      %26 = vst [vmem:[#allocation2 + $0x18] sm:$0xff] 0.0
      %27 = vst [vmem:[#allocation2 + $0x20] sm:$0xff] 0.0
      %28 = vst [vmem:[#allocation2 + $0x28] sm:$0xff] 0.0
      %29 = vst [vmem:[#allocation2 + $0x30] sm:$0xff] 0.0
      %30 = vst [vmem:[#allocation2 + $0x38] sm:$0xff] 0.0
      %31 = vst [vmem:[#allocation2 + $0x40] sm:$0xff] 0.0
      %32 = vst [vmem:[#allocation2 + $0x48] sm:$0xff] 0.0
      %33 = vst [vmem:[#allocation2 + $0x50] sm:$0xff] 0.0
      %34 = vst [vmem:[#allocation2 + $0x58] sm:$0xff] 0.0
      %35 = vst [vmem:[#allocation2 + $0x60] sm:$0xff] 0.0
      %36 = vst [vmem:[#allocation2 + $0x68] sm:$0xff] 0.0
      %37 = vst [vmem:[#allocation2 + $0x70] sm:$0xff] 0.0
      %38 = vst [vmem:[#allocation2 + $0x78] sm:$0xff] 0.0
      %39 = vst [vmem:[#allocation2 + $0x80] sm:$0xff] 0.0
      %40 = vst [vmem:[#allocation2 + $0x88] sm:$0xff] 0.0
      %41 = vst [vmem:[#allocation2 + $0x90] sm:$0xff] 0.0
      %42 = vst [vmem:[#allocation2 + $0x98] sm:$0xff] 0.0
      %43 = vst [vmem:[#allocation2 + $0xa0] sm:$0xff] 0.0
      %44 = vst [vmem:[#allocation2 + $0xa8] sm:$0xff] 0.0
      %45 = vst [vmem:[#allocation2 + $0xb0] sm:$0xff] 0.0
      %46 = vst [vmem:[#allocation2 + $0xb8] sm:$0xff] 0.0
      %47 = vst [vmem:[#allocation2 + $0xc0] sm:$0xff] 0.0
      %48 = vst [vmem:[#allocation2 + $0xc8] sm:$0xff] 0.0
      %49 = vst [vmem:[#allocation2 + $0xd0] sm:$0xff] 0.0
      %50 = vst [vmem:[#allocation2 + $0xd8] sm:$0xff] 0.0
      %51 = vst [vmem:[#allocation2 + $0xe0] sm:$0xff] 0.0
      %52 = vst [vmem:[#allocation2 + $0xe8] sm:$0xff] 0.0
      %53 = vst [vmem:[#allocation2 + $0xf0] sm:$0xff] 0.0
      %54 = vst [vmem:[#allocation2 + $0xf8] sm:$0xff] 0.0
      %55 = vst [vmem:[#allocation2 + $0x100] sm:$0xff] 0.0
      %56 = vst [vmem:[#allocation2 + $0x108] sm:$0xff] 0.0
      %57 = vst [vmem:[#allocation2 + $0x110] sm:$0xff] 0.0
      %58 = vst [vmem:[#allocation2 + $0x118] sm:$0xff] 0.0
      %59 = vst [vmem:[#allocation2 + $0x120] sm:$0xff] 0.0
      %60 = vst [vmem:[#allocation2 + $0x128] sm:$0xff] 0.0
      %61 = vst [vmem:[#allocation2 + $0x130] sm:$0xff] 0.0
      %62 = vst [vmem:[#allocation2 + $0x138] sm:$0xff] 0.0
      %63 = vst [vmem:[#allocation2 + $0x140] sm:$0xff] 0.0
      %64 = vst [vmem:[#allocation2 + $0x148] sm:$0xff] 0.0
      %65 = vst [vmem:[#allocation2 + $0x150] sm:$0xff] 0.0
      %66 = vst [vmem:[#allocation2 + $0x158] sm:$0xff] 0.0
      %67 = vst [vmem:[#allocation2 + $0x160] sm:$0xff] 0.0
      %68 = vst [vmem:[#allocation2 + $0x168] sm:$0xff] 0.0
      %69 = vst [vmem:[#allocation2 + $0x170] sm:$0xff] 0.0
      %70 = vst [vmem:[#allocation2 + $0x178] sm:$0xff] 0.0
      %71 = vst [vmem:[#allocation2 + $0x180] sm:$0xff] 0.0
      %72 = vst [vmem:[#allocation2 + $0x188] sm:$0xff] 0.0
      %73 = vst [vmem:[#allocation2 + $0x190] sm:$0xff] 0.0
      %74 = vst [vmem:[#allocation2 + $0x198] sm:$0xff] 0.0
      %75 = vst [vmem:[#allocation2 + $0x1a0] sm:$0xff] 0.0
      %76 = vst [vmem:[#allocation2 + $0x1a8] sm:$0xff] 0.0
      %77 = vst [vmem:[#allocation2 + $0x1b0] sm:$0xff] 0.0
      %78 = vst [vmem:[#allocation2 + $0x1b8] sm:$0xff] 0.0
      %79 = vst [vmem:[#allocation2 + $0x1c0] sm:$0xff] 0.0
      %80 = vst [vmem:[#allocation2 + $0x1c8] sm:$0xff] 0.0
      %81 = vst [vmem:[#allocation2 + $0x1d0] sm:$0xff] 0.0
      %82 = vst [vmem:[#allocation2 + $0x1d8] sm:$0xff] 0.0
      %83 = vst [vmem:[#allocation2 + $0x1e0] sm:$0xff] 0.0
      %84 = vst [vmem:[#allocation2 + $0x1e8] sm:$0xff] 0.0
      %85 = vst [vmem:[#allocation2 + $0x1f0] sm:$0xff] 0.0
      %86 = vst [vmem:[#allocation2 + $0x1f8] sm:$0xff] 0.0
    $region21: #{f.1} parent=1 // pred_fallthru
      _
    %v87 = vld [vmem:[#allocation2] sm:$0xff]
    %v88 = vld [vmem:[#allocation2 + $0x8] sm:$0xff]
    %v89 = vld [vmem:[#allocation2 + $0x10] sm:$0xff]
    %v90 = vld [vmem:[#allocation2 + $0x18] sm:$0xff]
    %v91 = vld [vmem:[#allocation2 + $0x20] sm:$0xff]
    %v92 = vld [vmem:[#allocation2 + $0x28] sm:$0xff]
    %v93 = vld [vmem:[#allocation2 + $0x30] sm:$0xff]
    %v94 = vld [vmem:[#allocation2 + $0x38] sm:$0xff]
    %v95 = vld [vmem:[#allocation2 + $0x40] sm:$0xff]
    %v96 = vld [vmem:[#allocation2 + $0x48] sm:$0xff]
    %v97 = vld [vmem:[#allocation2 + $0x50] sm:$0xff]
    %v98 = vld [vmem:[#allocation2 + $0x58] sm:$0xff]
    %v99 = vld [vmem:[#allocation2 + $0x60] sm:$0xff]
    %v100 = vld [vmem:[#allocation2 + $0x68] sm:$0xff]
    %v101 = vld [vmem:[#allocation2 + $0x70] sm:$0xff]
    %v102 = vld [vmem:[#allocation2 + $0x78] sm:$0xff]
    %v103 = vld [vmem:[#allocation2 + $0x80] sm:$0xff]
    %v104 = vld [vmem:[#allocation2 + $0x88] sm:$0xff]
    %v105 = vld [vmem:[#allocation2 + $0x90] sm:$0xff]
    %v106 = vld [vmem:[#allocation2 + $0x98] sm:$0xff]
    %v107 = vld [vmem:[#allocation2 + $0xa0] sm:$0xff]
    %v108 = vld [vmem:[#allocation2 + $0xa8] sm:$0xff]
    %v109 = vld [vmem:[#allocation2 + $0xb0] sm:$0xff]
    %v110 = vld [vmem:[#allocation2 + $0xb8] sm:$0xff]
    %v111 = vld [vmem:[#allocation2 + $0xc0] sm:$0xff]
    %v112 = vld [vmem:[#allocation2 + $0xc8] sm:$0xff]
    %v113 = vld [vmem:[#allocation2 + $0xd0] sm:$0xff]
    %v114 = vld [vmem:[#allocation2 + $0xd8] sm:$0xff]
    %v115 = vld [vmem:[#allocation2 + $0xe0] sm:$0xff]
    %v116 = vld [vmem:[#allocation2 + $0xe8] sm:$0xff]
    %v117 = vld [vmem:[#allocation2 + $0xf0] sm:$0xff]
    %v118 = vld [vmem:[#allocation2 + $0xf8] sm:$0xff]
    %v119 = vld [vmem:[#allocation2 + $0x100] sm:$0xff]
    %v120 = vld [vmem:[#allocation2 + $0x108] sm:$0xff]
    %v121 = vld [vmem:[#allocation2 + $0x110] sm:$0xff]
    %v122 = vld [vmem:[#allocation2 + $0x118] sm:$0xff]
    %v123 = vld [vmem:[#allocation2 + $0x120] sm:$0xff]
    %v124 = vld [vmem:[#allocation2 + $0x128] sm:$0xff]
    %v125 = vld [vmem:[#allocation2 + $0x130] sm:$0xff]
    %v126 = vld [vmem:[#allocation2 + $0x138] sm:$0xff]
    %v127 = vld [vmem:[#allocation2 + $0x140] sm:$0xff]
    %v128 = vld [vmem:[#allocation2 + $0x148] sm:$0xff]
    %v129 = vld [vmem:[#allocation2 + $0x150] sm:$0xff]
    %v130 = vld [vmem:[#allocation2 + $0x158] sm:$0xff]
    %v131 = vld [vmem:[#allocation2 + $0x160] sm:$0xff]
    %v132 = vld [vmem:[#allocation2 + $0x168] sm:$0xff]
    %v133 = vld [vmem:[#allocation2 + $0x170] sm:$0xff]
    %v134 = vld [vmem:[#allocation2 + $0x178] sm:$0xff]
    %v135 = vld [vmem:[#allocation2 + $0x180] sm:$0xff]
    %v136 = vld [vmem:[#allocation2 + $0x188] sm:$0xff]
    %v137 = vld [vmem:[#allocation2 + $0x190] sm:$0xff]
    %v138 = vld [vmem:[#allocation2 + $0x198] sm:$0xff]
    %v139 = vld [vmem:[#allocation2 + $0x1a0] sm:$0xff]
    %v140 = vld [vmem:[#allocation2 + $0x1a8] sm:$0xff]
    %v141 = vld [vmem:[#allocation2 + $0x1b0] sm:$0xff]
    %v142 = vld [vmem:[#allocation2 + $0x1b8] sm:$0xff]
    %v143 = vld [vmem:[#allocation2 + $0x1c0] sm:$0xff]
    %v144 = vld [vmem:[#allocation2 + $0x1c8] sm:$0xff]
    %v145 = vld [vmem:[#allocation2 + $0x1d0] sm:$0xff]
    %v146 = vld [vmem:[#allocation2 + $0x1d8] sm:$0xff]
    %v147 = vld [vmem:[#allocation2 + $0x1e0] sm:$0xff]
    %v148 = vld [vmem:[#allocation2 + $0x1e8] sm:$0xff]
    %v149 = vld [vmem:[#allocation2 + $0x1f0] sm:$0xff]
    %v150 = vld [vmem:[#allocation2 + $0x1f8] sm:$0xff]
    %v151 = vld [vmem:[%s0] sm:$0xff]
    %v152 = vld [vmem:[%s0 + $0x8] sm:$0xff]
    %v153 = vld [vmem:[%s0 + $0x10] sm:$0xff]
    %v154 = vld [vmem:[%s0 + $0x18] sm:$0xff]
    %v155 = vld [vmem:[%s0 + $0x20] sm:$0xff]
    %v156 = vld [vmem:[%s0 + $0x28] sm:$0xff]
    %v157 = vld [vmem:[%s0 + $0x30] sm:$0xff]
    %v158 = vld [vmem:[%s0 + $0x38] sm:$0xff]
    %v159 = vld [vmem:[%s0 + $0x40] sm:$0xff]
    %v160 = vld [vmem:[%s0 + $0x48] sm:$0xff]
    %v161 = vld [vmem:[%s0 + $0x50] sm:$0xff]
    %v162 = vld [vmem:[%s0 + $0x58] sm:$0xff]
    %v163 = vld [vmem:[%s0 + $0x60] sm:$0xff]
    %v164 = vld [vmem:[%s0 + $0x68] sm:$0xff]
    %v165 = vld [vmem:[%s0 + $0x70] sm:$0xff]
    %v166 = vld [vmem:[%s0 + $0x78] sm:$0xff]
    %v167 = vld [vmem:[%s0 + $0x80] sm:$0xff]
    %v168 = vld [vmem:[%s0 + $0x88] sm:$0xff]
    %v169 = vld [vmem:[%s0 + $0x90] sm:$0xff]
    %v170 = vld [vmem:[%s0 + $0x98] sm:$0xff]
    %v171 = vld [vmem:[%s0 + $0xa0] sm:$0xff]
    %v172 = vld [vmem:[%s0 + $0xa8] sm:$0xff]
    %v173 = vld [vmem:[%s0 + $0xb0] sm:$0xff]
    %v174 = vld [vmem:[%s0 + $0xb8] sm:$0xff]
    %v175 = vld [vmem:[%s0 + $0xc0] sm:$0xff]
    %v176 = vld [vmem:[%s0 + $0xc8] sm:$0xff]
    %v177 = vld [vmem:[%s0 + $0xd0] sm:$0xff]
    %v178 = vld [vmem:[%s0 + $0xd8] sm:$0xff]
    %v179 = vld [vmem:[%s0 + $0xe0] sm:$0xff]
    %v180 = vld [vmem:[%s0 + $0xe8] sm:$0xff]
    %v181 = vld [vmem:[%s0 + $0xf0] sm:$0xff]
    %v182 = vld [vmem:[%s0 + $0xf8] sm:$0xff]
    %v183 = vld [vmem:[%s0 + $0x100] sm:$0xff]
    %v184 = vld [vmem:[%s0 + $0x108] sm:$0xff]
    %v185 = vld [vmem:[%s0 + $0x110] sm:$0xff]
    %v186 = vld [vmem:[%s0 + $0x118] sm:$0xff]
    %v187 = vld [vmem:[%s0 + $0x120] sm:$0xff]
    %v188 = vld [vmem:[%s0 + $0x128] sm:$0xff]
    %v189 = vld [vmem:[%s0 + $0x130] sm:$0xff]
    %v190 = vld [vmem:[%s0 + $0x138] sm:$0xff]
    %v191 = vld [vmem:[%s0 + $0x140] sm:$0xff]
    %v192 = vld [vmem:[%s0 + $0x148] sm:$0xff]
    %v193 = vld [vmem:[%s0 + $0x150] sm:$0xff]
    %v194 = vld [vmem:[%s0 + $0x158] sm:$0xff]
    %v195 = vld [vmem:[%s0 + $0x160] sm:$0xff]
    %v196 = vld [vmem:[%s0 + $0x168] sm:$0xff]
    %v197 = vld [vmem:[%s0 + $0x170] sm:$0xff]
    %v198 = vld [vmem:[%s0 + $0x178] sm:$0xff]
    %v199 = vld [vmem:[%s0 + $0x180] sm:$0xff]
    %v200 = vld [vmem:[%s0 + $0x188] sm:$0xff]
    %v201 = vld [vmem:[%s0 + $0x190] sm:$0xff]
    %v202 = vld [vmem:[%s0 + $0x198] sm:$0xff]
    %v203 = vld [vmem:[%s0 + $0x1a0] sm:$0xff]
    %v204 = vld [vmem:[%s0 + $0x1a8] sm:$0xff]
    %v205 = vld [vmem:[%s0 + $0x1b0] sm:$0xff]
    %v206 = vld [vmem:[%s0 + $0x1b8] sm:$0xff]
    %v207 = vld [vmem:[%s0 + $0x1c0] sm:$0xff]
    %v208 = vld [vmem:[%s0 + $0x1c8] sm:$0xff]
    %v209 = vld [vmem:[%s0 + $0x1d0] sm:$0xff]
    %v210 = vld [vmem:[%s0 + $0x1d8] sm:$0xff]
    %v211 = vld [vmem:[%s0 + $0x1e0] sm:$0xff]
    %v212 = vld [vmem:[%s0 + $0x1e8] sm:$0xff]
    %v213 = vld [vmem:[%s0 + $0x1f0] sm:$0xff]
    %v214 = vld [vmem:[%s0 + $0x1f8] sm:$0xff]
    %v215 = vld [vmem:[%s1] sm:$0xf]
    %v216 = vld [vmem:[%s1 + $0x4] sm:$0xf]
    %v217 = vld [vmem:[%s1 + $0x8] sm:$0xf]
    %v218 = vld [vmem:[%s1 + $0xc] sm:$0xf]
    %v219 = vld [vmem:[%s1 + $0x10] sm:$0xf]
    %v220 = vld [vmem:[%s1 + $0x14] sm:$0xf]
    %v221 = vld [vmem:[%s1 + $0x18] sm:$0xf]
    %v222 = vld [vmem:[%s1 + $0x1c] sm:$0xf]
    %v223 = vld [vmem:[%s1 + $0x20] sm:$0xf]
    %v224 = vld [vmem:[%s1 + $0x24] sm:$0xf]
    %v225 = vld [vmem:[%s1 + $0x28] sm:$0xf]
    %v226 = vld [vmem:[%s1 + $0x2c] sm:$0xf]
    %v227 = vld [vmem:[%s1 + $0x30] sm:$0xf]
    %v228 = vld [vmem:[%s1 + $0x34] sm:$0xf]
    %v229 = vld [vmem:[%s1 + $0x38] sm:$0xf]
    %v230 = vld [vmem:[%s1 + $0x3c] sm:$0xf]
    %v231 = vld [vmem:[%s1 + $0x40] sm:$0xf]
    %v232 = vld [vmem:[%s1 + $0x44] sm:$0xf]
    %v233 = vld [vmem:[%s1 + $0x48] sm:$0xf]
    %v234 = vld [vmem:[%s1 + $0x4c] sm:$0xf]
    %v235 = vld [vmem:[%s1 + $0x50] sm:$0xf]
    %v236 = vld [vmem:[%s1 + $0x54] sm:$0xf]
    %v237 = vld [vmem:[%s1 + $0x58] sm:$0xf]
    %v238 = vld [vmem:[%s1 + $0x5c] sm:$0xf]
    %v239 = vld [vmem:[%s1 + $0x60] sm:$0xf]
    %v240 = vld [vmem:[%s1 + $0x64] sm:$0xf]
    %v241 = vld [vmem:[%s1 + $0x68] sm:$0xf]
    %v242 = vld [vmem:[%s1 + $0x6c] sm:$0xf]
    %v243 = vld [vmem:[%s1 + $0x70] sm:$0xf]
    %v244 = vld [vmem:[%s1 + $0x74] sm:$0xf]
    %v245 = vld [vmem:[%s1 + $0x78] sm:$0xf]
    %v246 = vld [vmem:[%s1 + $0x7c] sm:$0xf]
    %v311 = vunpack.c.l.b16 %v151
    %v312 = vunpack.c.h.b16 %v151
    %v313 = vunpack.c.l.b16 %v152
    %v314 = vunpack.c.h.b16 %v152
    %v315 = vunpack.c.l.b16 %v153
    %v316 = vunpack.c.h.b16 %v153
    %v317 = vunpack.c.l.b16 %v154
    %v318 = vunpack.c.h.b16 %v154
    %v319 = vunpack.c.l.b16 %v155
    %v320 = vunpack.c.h.b16 %v155
    %v321 = vunpack.c.l.b16 %v156
    %v322 = vunpack.c.h.b16 %v156
    %v323 = vunpack.c.l.b16 %v157
    %v324 = vunpack.c.h.b16 %v157
    %v325 = vunpack.c.l.b16 %v158
    %v326 = vunpack.c.h.b16 %v158
    %v327 = vunpack.c.l.b16 %v159
    %v328 = vunpack.c.h.b16 %v159
    %v329 = vunpack.c.l.b16 %v160
    %v330 = vunpack.c.h.b16 %v160
    %v331 = vunpack.c.l.b16 %v161
    %v332 = vunpack.c.h.b16 %v161
    %v333 = vunpack.c.l.b16 %v162
    %v334 = vunpack.c.h.b16 %v162
    %v335 = vunpack.c.l.b16 %v163
    %v336 = vunpack.c.h.b16 %v163
    %v337 = vunpack.c.l.b16 %v164
    %v338 = vunpack.c.h.b16 %v164
    %v339 = vunpack.c.l.b16 %v165
    %v340 = vunpack.c.h.b16 %v165
    %v341 = vunpack.c.l.b16 %v166
    %v342 = vunpack.c.h.b16 %v166
    %v343 = vunpack.c.l.b16 %v167
    %v344 = vunpack.c.h.b16 %v167
    %v345 = vunpack.c.l.b16 %v168
    %v346 = vunpack.c.h.b16 %v168
    %v347 = vunpack.c.l.b16 %v169
    %v348 = vunpack.c.h.b16 %v169
    %v349 = vunpack.c.l.b16 %v170
    %v350 = vunpack.c.h.b16 %v170
    %v351 = vunpack.c.l.b16 %v171
    %v352 = vunpack.c.h.b16 %v171
    %v353 = vunpack.c.l.b16 %v172
    %v354 = vunpack.c.h.b16 %v172
    %v355 = vunpack.c.l.b16 %v173
    %v356 = vunpack.c.h.b16 %v173
    %v357 = vunpack.c.l.b16 %v174
    %v358 = vunpack.c.h.b16 %v174
    %v359 = vunpack.c.l.b16 %v175
    %v360 = vunpack.c.h.b16 %v175
    %v361 = vunpack.c.l.b16 %v176
    %v362 = vunpack.c.h.b16 %v176
    %v363 = vunpack.c.l.b16 %v177
    %v364 = vunpack.c.h.b16 %v177
    %v365 = vunpack.c.l.b16 %v178
    %v366 = vunpack.c.h.b16 %v178
    %v367 = vunpack.c.l.b16 %v179
    %v368 = vunpack.c.h.b16 %v179
    %v369 = vunpack.c.l.b16 %v180
    %v370 = vunpack.c.h.b16 %v180
    %v371 = vunpack.c.l.b16 %v181
    %v372 = vunpack.c.h.b16 %v181
    %v373 = vunpack.c.l.b16 %v182
    %v374 = vunpack.c.h.b16 %v182
    %v375 = vunpack.c.l.b16 %v183
    %v376 = vunpack.c.h.b16 %v183
    %v377 = vunpack.c.l.b16 %v184
    %v378 = vunpack.c.h.b16 %v184
    %v379 = vunpack.c.l.b16 %v185
    %v380 = vunpack.c.h.b16 %v185
    %v381 = vunpack.c.l.b16 %v186
    %v382 = vunpack.c.h.b16 %v186
    %v383 = vunpack.c.l.b16 %v187
    %v384 = vunpack.c.h.b16 %v187
    %v385 = vunpack.c.l.b16 %v188
    %v386 = vunpack.c.h.b16 %v188
    %v387 = vunpack.c.l.b16 %v189
    %v388 = vunpack.c.h.b16 %v189
    %v389 = vunpack.c.l.b16 %v190
    %v390 = vunpack.c.h.b16 %v190
    %v391 = vunpack.c.l.b16 %v191
    %v392 = vunpack.c.h.b16 %v191
    %v393 = vunpack.c.l.b16 %v192
    %v394 = vunpack.c.h.b16 %v192
    %v395 = vunpack.c.l.b16 %v193
    %v396 = vunpack.c.h.b16 %v193
    %v397 = vunpack.c.l.b16 %v194
    %v398 = vunpack.c.h.b16 %v194
    %v399 = vunpack.c.l.b16 %v195
    %v400 = vunpack.c.h.b16 %v195
    %v401 = vunpack.c.l.b16 %v196
    %v402 = vunpack.c.h.b16 %v196
    %v403 = vunpack.c.l.b16 %v197
    %v404 = vunpack.c.h.b16 %v197
    %v405 = vunpack.c.l.b16 %v198
    %v406 = vunpack.c.h.b16 %v198
    %v407 = vunpack.c.l.b16 %v199
    %v408 = vunpack.c.h.b16 %v199
    %v409 = vunpack.c.l.b16 %v200
    %v410 = vunpack.c.h.b16 %v200
    %v411 = vunpack.c.l.b16 %v201
    %v412 = vunpack.c.h.b16 %v201
    %v413 = vunpack.c.l.b16 %v202
    %v414 = vunpack.c.h.b16 %v202
    %v415 = vunpack.c.l.b16 %v203
    %v416 = vunpack.c.h.b16 %v203
    %v417 = vunpack.c.l.b16 %v204
    %v418 = vunpack.c.h.b16 %v204
    %v419 = vunpack.c.l.b16 %v205
    %v420 = vunpack.c.h.b16 %v205
    %v421 = vunpack.c.l.b16 %v206
    %v422 = vunpack.c.h.b16 %v206
    %v423 = vunpack.c.l.b16 %v207
    %v424 = vunpack.c.h.b16 %v207
    %v425 = vunpack.c.l.b16 %v208
    %v426 = vunpack.c.h.b16 %v208
    %v427 = vunpack.c.l.b16 %v209
    %v428 = vunpack.c.h.b16 %v209
    %v429 = vunpack.c.l.b16 %v210
    %v430 = vunpack.c.h.b16 %v210
    %v431 = vunpack.c.l.b16 %v211
    %v432 = vunpack.c.h.b16 %v211
    %v433 = vunpack.c.l.b16 %v212
    %v434 = vunpack.c.h.b16 %v212
    %v435 = vunpack.c.l.b16 %v213
    %v436 = vunpack.c.h.b16 %v213
    %v437 = vunpack.c.l.b16 %v214
    %v438 = vunpack.c.h.b16 %v214
    %v439 = vpack.c.b16 %v313, %v311
    %v440 = vpack.c.b16 %v314, %v312
    %v441 = vpack.c.b16 %v317, %v315
    %v442 = vpack.c.b16 %v318, %v316
    %v443 = vpack.c.b16 %v321, %v319
    %v444 = vpack.c.b16 %v322, %v320
    %v445 = vpack.c.b16 %v325, %v323
    %v446 = vpack.c.b16 %v326, %v324
    %v447 = vpack.c.b16 %v329, %v327
    %v448 = vpack.c.b16 %v330, %v328
    %v449 = vpack.c.b16 %v333, %v331
    %v450 = vpack.c.b16 %v334, %v332
    %v451 = vpack.c.b16 %v337, %v335
    %v452 = vpack.c.b16 %v338, %v336
    %v453 = vpack.c.b16 %v341, %v339
    %v454 = vpack.c.b16 %v342, %v340
    %v455 = vpack.c.b16 %v345, %v343
    %v456 = vpack.c.b16 %v346, %v344
    %v457 = vpack.c.b16 %v349, %v347
    %v458 = vpack.c.b16 %v350, %v348
    %v459 = vpack.c.b16 %v353, %v351
    %v460 = vpack.c.b16 %v354, %v352
    %v461 = vpack.c.b16 %v357, %v355
    %v462 = vpack.c.b16 %v358, %v356
    %v463 = vpack.c.b16 %v361, %v359
    %v464 = vpack.c.b16 %v362, %v360
    %v465 = vpack.c.b16 %v365, %v363
    %v466 = vpack.c.b16 %v366, %v364
    %v467 = vpack.c.b16 %v369, %v367
    %v468 = vpack.c.b16 %v370, %v368
    %v469 = vpack.c.b16 %v373, %v371
    %v470 = vpack.c.b16 %v374, %v372
    %v471 = vpack.c.b16 %v377, %v375
    %v472 = vpack.c.b16 %v378, %v376
    %v473 = vpack.c.b16 %v381, %v379
    %v474 = vpack.c.b16 %v382, %v380
    %v475 = vpack.c.b16 %v385, %v383
    %v476 = vpack.c.b16 %v386, %v384
    %v477 = vpack.c.b16 %v389, %v387
    %v478 = vpack.c.b16 %v390, %v388
    %v479 = vpack.c.b16 %v393, %v391
    %v480 = vpack.c.b16 %v394, %v392
    %v481 = vpack.c.b16 %v397, %v395
    %v482 = vpack.c.b16 %v398, %v396
    %v483 = vpack.c.b16 %v401, %v399
    %v484 = vpack.c.b16 %v402, %v400
    %v485 = vpack.c.b16 %v405, %v403
    %v486 = vpack.c.b16 %v406, %v404
    %v487 = vpack.c.b16 %v409, %v407
    %v488 = vpack.c.b16 %v410, %v408
    %v489 = vpack.c.b16 %v413, %v411
    %v490 = vpack.c.b16 %v414, %v412
    %v491 = vpack.c.b16 %v417, %v415
    %v492 = vpack.c.b16 %v418, %v416
    %v493 = vpack.c.b16 %v421, %v419
    %v494 = vpack.c.b16 %v422, %v420
    %v495 = vpack.c.b16 %v425, %v423
    %v496 = vpack.c.b16 %v426, %v424
    %v497 = vpack.c.b16 %v429, %v427
    %v498 = vpack.c.b16 %v430, %v428
    %v499 = vpack.c.b16 %v433, %v431
    %v500 = vpack.c.b16 %v434, %v432
    %v501 = vpack.c.b16 %v437, %v435
    %v502 = vpack.c.b16 %v438, %v436
    %v599 = vunpack.c.l.b16 %v215
    %v600 = vunpack.c.l.b16 %v216
    %v601 = vunpack.c.l.b16 %v217
    %v602 = vunpack.c.l.b16 %v218
    %v603 = vunpack.c.l.b16 %v219
    %v604 = vunpack.c.l.b16 %v220
    %v605 = vunpack.c.l.b16 %v221
    %v606 = vunpack.c.l.b16 %v222
    %v607 = vunpack.c.l.b16 %v223
    %v608 = vunpack.c.l.b16 %v224
    %v609 = vunpack.c.l.b16 %v225
    %v610 = vunpack.c.l.b16 %v226
    %v611 = vunpack.c.l.b16 %v227
    %v612 = vunpack.c.l.b16 %v228
    %v613 = vunpack.c.l.b16 %v229
    %v614 = vunpack.c.l.b16 %v230
    %v615 = vunpack.c.l.b16 %v231
    %v616 = vunpack.c.l.b16 %v232
    %v617 = vunpack.c.l.b16 %v233
    %v618 = vunpack.c.l.b16 %v234
    %v619 = vunpack.c.l.b16 %v235
    %v620 = vunpack.c.l.b16 %v236
    %v621 = vunpack.c.l.b16 %v237
    %v622 = vunpack.c.l.b16 %v238
    %v623 = vunpack.c.l.b16 %v239
    %v624 = vunpack.c.l.b16 %v240
    %v625 = vunpack.c.l.b16 %v241
    %v626 = vunpack.c.l.b16 %v242
    %v627 = vunpack.c.l.b16 %v243
    %v628 = vunpack.c.l.b16 %v244
    %v629 = vunpack.c.l.b16 %v245
    %v630 = vunpack.c.l.b16 %v246
    %v631 = vpack.c.b16 %v600, %v599
    %v632 = vpack.c.b16 %v602, %v601
    %v633 = vpack.c.b16 %v604, %v603
    %v634 = vpack.c.b16 %v606, %v605
    %v635 = vpack.c.b16 %v608, %v607
    %v636 = vpack.c.b16 %v610, %v609
    %v637 = vpack.c.b16 %v612, %v611
    %v638 = vpack.c.b16 %v614, %v613
    %v639 = vpack.c.b16 %v616, %v615
    %v640 = vpack.c.b16 %v618, %v617
    %v641 = vpack.c.b16 %v620, %v619
    %v642 = vpack.c.b16 %v622, %v621
    %v643 = vpack.c.b16 %v624, %v623
    %v644 = vpack.c.b16 %v626, %v625
    %v645 = vpack.c.b16 %v628, %v627
    %v646 = vpack.c.b16 %v630, %v629
    %663 = vmatprep.subr.bf16.mxu0 0
    %664 = vmatpush1.bf16.msra.mxu0 %v631
    %665 = vmatprep.subr.bf16.mxu0 0
    %666 = vmatpush1.bf16.msra.mxu0 %v632
    %667 = vmatprep.subr.bf16.mxu0 0
    %668 = vmatpush1.bf16.msra.mxu0 %v633
    %669 = vmatprep.subr.bf16.mxu0 0
    %670 = vmatpush1.bf16.msra.mxu0 %v634
    %671 = vmatprep.subr.bf16.mxu0 0
    %672 = vmatpush1.bf16.msra.mxu0 %v635
    %673 = vmatprep.subr.bf16.mxu0 0
    %674 = vmatpush1.bf16.msra.mxu0 %v636
    %675 = vmatprep.subr.bf16.mxu0 0
    %676 = vmatpush1.bf16.msra.mxu0 %v637
    %677 = vmatprep.subr.bf16.mxu0 0
    %678 = vmatpush1.bf16.msra.mxu0 %v638
    %679 = vmatprep.subr.bf16.mxu0 0
    %680 = vmatpush1.bf16.msra.mxu0 %v639
    %681 = vmatprep.subr.bf16.mxu0 0
    %682 = vmatpush1.bf16.msra.mxu0 %v640
    %683 = vmatprep.subr.bf16.mxu0 0
    %684 = vmatpush1.bf16.msra.mxu0 %v641
    %685 = vmatprep.subr.bf16.mxu0 0
    %686 = vmatpush1.bf16.msra.mxu0 %v642
    %687 = vmatprep.subr.bf16.mxu0 0
    %688 = vmatpush1.bf16.msra.mxu0 %v643
    %689 = vmatprep.subr.bf16.mxu0 0
    %690 = vmatpush1.bf16.msra.mxu0 %v644
    %691 = vmatprep.subr.bf16.mxu0 0
    %692 = vmatpush1.bf16.msra.mxu0 %v645
    %693 = vmatprep.subr.bf16.mxu0 0
    %694 = vmatpush1.bf16.msra.mxu0 %v646
    %695 = vmatprep.mubr.bf16.mxu0 %v440
    %696 = vmatmul.mubr.bf16.gmra.mrb[0].mxu0 %v439
    %v697 = vpop.f32.mrb[0].mxu0
    %v698 = vadd.f32 0.0, %v697
    %v699 = vpop.f32.mrb[0].mxu0
    %v700 = vpop.f32.mrb[0].mxu0
    %v701 = vadd.f32 0.0, %v700
    %v702 = vpop.f32.mrb[0].mxu0
    %703 = vmatprep.mubr.bf16.mxu0 %v442
    %704 = vmatmul.mubr.bf16.gmra.mrb[0].mxu0 %v441
    %v705 = vpop.f32.mrb[0].mxu0
    %v706 = vadd.f32 0.0, %v705
    %v707 = vpop.f32.mrb[0].mxu0
    %v708 = vpop.f32.mrb[0].mxu0
    %v709 = vadd.f32 0.0, %v708
    %v710 = vpop.f32.mrb[0].mxu0
    %711 = vmatprep.mubr.bf16.mxu0 %v444
    %712 = vmatmul.mubr.bf16.gmra.mrb[0].mxu0 %v443
    %v713 = vpop.f32.mrb[0].mxu0
    %v714 = vadd.f32 0.0, %v713
    %v715 = vpop.f32.mrb[0].mxu0
    %v716 = vpop.f32.mrb[0].mxu0
    %v717 = vadd.f32 0.0, %v716
    %v718 = vpop.f32.mrb[0].mxu0
    %719 = vmatprep.mubr.bf16.mxu0 %v446
    %720 = vmatmul.mubr.bf16.gmra.mrb[0].mxu0 %v445
    %v721 = vpop.f32.mrb[0].mxu0
    %v722 = vadd.f32 0.0, %v721
    %v723 = vpop.f32.mrb[0].mxu0
    %v724 = vpop.f32.mrb[0].mxu0
    %v725 = vadd.f32 0.0, %v724
    %v726 = vpop.f32.mrb[0].mxu0
    %727 = vmatprep.mubr.bf16.mxu0 %v448
    %728 = vmatmul.mubr.bf16.gmra.mrb[0].mxu0 %v447
    %v729 = vpop.f32.mrb[0].mxu0
    %v730 = vadd.f32 0.0, %v729
    %v731 = vpop.f32.mrb[0].mxu0
    %v732 = vpop.f32.mrb[0].mxu0
    %v733 = vadd.f32 0.0, %v732
    %v734 = vpop.f32.mrb[0].mxu0
    %735 = vmatprep.mubr.bf16.mxu0 %v450
    %736 = vmatmul.mubr.bf16.gmra.mrb[0].mxu0 %v449
    %v737 = vpop.f32.mrb[0].mxu0
    %v738 = vadd.f32 0.0, %v737
    %v739 = vpop.f32.mrb[0].mxu0
    %v740 = vpop.f32.mrb[0].mxu0
    %v741 = vadd.f32 0.0, %v740
    %v742 = vpop.f32.mrb[0].mxu0
    %743 = vmatprep.mubr.bf16.mxu0 %v452
    %744 = vmatmul.mubr.bf16.gmra.mrb[0].mxu0 %v451
    %v745 = vpop.f32.mrb[0].mxu0
    %v746 = vadd.f32 0.0, %v745
    %v747 = vpop.f32.mrb[0].mxu0
    %v748 = vpop.f32.mrb[0].mxu0
    %v749 = vadd.f32 0.0, %v748
    %v750 = vpop.f32.mrb[0].mxu0
    %751 = vmatprep.mubr.bf16.mxu0 %v454
    %752 = vmatmul.mubr.bf16.gmra.mrb[0].mxu0 %v453
    %v753 = vpop.f32.mrb[0].mxu0
    %v754 = vadd.f32 0.0, %v753
    %v755 = vpop.f32.mrb[0].mxu0
    %v756 = vpop.f32.mrb[0].mxu0
    %v757 = vadd.f32 0.0, %v756
    %v758 = vpop.f32.mrb[0].mxu0
    %759 = vmatprep.mubr.bf16.mxu0 %v456
    %760 = vmatmul.mubr.bf16.gmra.mrb[0].mxu0 %v455
    %v761 = vpop.f32.mrb[0].mxu0
    %v762 = vadd.f32 0.0, %v761
    %v763 = vpop.f32.mrb[0].mxu0
    %v764 = vpop.f32.mrb[0].mxu0
    %v765 = vadd.f32 0.0, %v764
    %v766 = vpop.f32.mrb[0].mxu0
    %767 = vmatprep.mubr.bf16.mxu0 %v458
    %768 = vmatmul.mubr.bf16.gmra.mrb[0].mxu0 %v457
    %v769 = vpop.f32.mrb[0].mxu0
    %v770 = vadd.f32 0.0, %v769
    %v771 = vpop.f32.mrb[0].mxu0
    %v772 = vpop.f32.mrb[0].mxu0
    %v773 = vadd.f32 0.0, %v772
    %v774 = vpop.f32.mrb[0].mxu0
    %775 = vmatprep.mubr.bf16.mxu0 %v460
    %776 = vmatmul.mubr.bf16.gmra.mrb[0].mxu0 %v459
    %v777 = vpop.f32.mrb[0].mxu0
    %v778 = vadd.f32 0.0, %v777
    %v779 = vpop.f32.mrb[0].mxu0
    %v780 = vpop.f32.mrb[0].mxu0
    %v781 = vadd.f32 0.0, %v780
    %v782 = vpop.f32.mrb[0].mxu0
    %783 = vmatprep.mubr.bf16.mxu0 %v462
    %784 = vmatmul.mubr.bf16.gmra.mrb[0].mxu0 %v461
    %v785 = vpop.f32.mrb[0].mxu0
    %v786 = vadd.f32 0.0, %v785
    %v787 = vpop.f32.mrb[0].mxu0
    %v788 = vpop.f32.mrb[0].mxu0
    %v789 = vadd.f32 0.0, %v788
    %v790 = vpop.f32.mrb[0].mxu0
    %791 = vmatprep.mubr.bf16.mxu0 %v464
    %792 = vmatmul.mubr.bf16.gmra.mrb[0].mxu0 %v463
    %v793 = vpop.f32.mrb[0].mxu0
    %v794 = vadd.f32 0.0, %v793
    %v795 = vpop.f32.mrb[0].mxu0
    %v796 = vpop.f32.mrb[0].mxu0
    %v797 = vadd.f32 0.0, %v796
    %v798 = vpop.f32.mrb[0].mxu0
    %799 = vmatprep.mubr.bf16.mxu0 %v466
    %800 = vmatmul.mubr.bf16.gmra.mrb[0].mxu0 %v465
    %v801 = vpop.f32.mrb[0].mxu0
    %v802 = vadd.f32 0.0, %v801
    %v803 = vpop.f32.mrb[0].mxu0
    %v804 = vpop.f32.mrb[0].mxu0
    %v805 = vadd.f32 0.0, %v804
    %v806 = vpop.f32.mrb[0].mxu0
    %807 = vmatprep.mubr.bf16.mxu0 %v468
    %808 = vmatmul.mubr.bf16.gmra.mrb[0].mxu0 %v467
    %v809 = vpop.f32.mrb[0].mxu0
    %v810 = vadd.f32 0.0, %v809
    %v811 = vpop.f32.mrb[0].mxu0
    %v812 = vpop.f32.mrb[0].mxu0
    %v813 = vadd.f32 0.0, %v812
    %v814 = vpop.f32.mrb[0].mxu0
    %815 = vmatprep.mubr.bf16.mxu0 %v470
    %816 = vmatmul.mubr.bf16.gmra.mrb[0].mxu0 %v469
    %v817 = vpop.f32.mrb[0].mxu0
    %v818 = vadd.f32 0.0, %v817
    %v819 = vpop.f32.mrb[0].mxu0
    %v820 = vpop.f32.mrb[0].mxu0
    %v821 = vadd.f32 0.0, %v820
    %v822 = vpop.f32.mrb[0].mxu0
    %823 = vmatprep.mubr.bf16.mxu0 %v472
    %824 = vmatmul.mubr.bf16.gmra.mrb[0].mxu0 %v471
    %v825 = vpop.f32.mrb[0].mxu0
    %v826 = vadd.f32 0.0, %v825
    %v827 = vpop.f32.mrb[0].mxu0
    %v828 = vpop.f32.mrb[0].mxu0
    %v829 = vadd.f32 0.0, %v828
    %v830 = vpop.f32.mrb[0].mxu0
    %831 = vmatprep.mubr.bf16.mxu0 %v474
    %832 = vmatmul.mubr.bf16.gmra.mrb[0].mxu0 %v473
    %v833 = vpop.f32.mrb[0].mxu0
    %v834 = vadd.f32 0.0, %v833
    %v835 = vpop.f32.mrb[0].mxu0
    %v836 = vpop.f32.mrb[0].mxu0
    %v837 = vadd.f32 0.0, %v836
    %v838 = vpop.f32.mrb[0].mxu0
    %839 = vmatprep.mubr.bf16.mxu0 %v476
    %840 = vmatmul.mubr.bf16.gmra.mrb[0].mxu0 %v475
    %v841 = vpop.f32.mrb[0].mxu0
    %v842 = vadd.f32 0.0, %v841
    %v843 = vpop.f32.mrb[0].mxu0
    %v844 = vpop.f32.mrb[0].mxu0
    %v845 = vadd.f32 0.0, %v844
    %v846 = vpop.f32.mrb[0].mxu0
    %847 = vmatprep.mubr.bf16.mxu0 %v478
    %848 = vmatmul.mubr.bf16.gmra.mrb[0].mxu0 %v477
    %v849 = vpop.f32.mrb[0].mxu0
    %v850 = vadd.f32 0.0, %v849
    %v851 = vpop.f32.mrb[0].mxu0
    %v852 = vpop.f32.mrb[0].mxu0
    %v853 = vadd.f32 0.0, %v852
    %v854 = vpop.f32.mrb[0].mxu0
    %855 = vmatprep.mubr.bf16.mxu0 %v480
    %856 = vmatmul.mubr.bf16.gmra.mrb[0].mxu0 %v479
    %v857 = vpop.f32.mrb[0].mxu0
    %v858 = vadd.f32 0.0, %v857
    %v859 = vpop.f32.mrb[0].mxu0
    %v860 = vpop.f32.mrb[0].mxu0
    %v861 = vadd.f32 0.0, %v860
    %v862 = vpop.f32.mrb[0].mxu0
    %863 = vmatprep.mubr.bf16.mxu0 %v482
    %864 = vmatmul.mubr.bf16.gmra.mrb[0].mxu0 %v481
    %v865 = vpop.f32.mrb[0].mxu0
    %v866 = vadd.f32 0.0, %v865
    %v867 = vpop.f32.mrb[0].mxu0
    %v868 = vpop.f32.mrb[0].mxu0
    %v869 = vadd.f32 0.0, %v868
    %v870 = vpop.f32.mrb[0].mxu0
    %871 = vmatprep.mubr.bf16.mxu0 %v484
    %872 = vmatmul.mubr.bf16.gmra.mrb[0].mxu0 %v483
    %v873 = vpop.f32.mrb[0].mxu0
    %v874 = vadd.f32 0.0, %v873
    %v875 = vpop.f32.mrb[0].mxu0
    %v876 = vpop.f32.mrb[0].mxu0
    %v877 = vadd.f32 0.0, %v876
    %v878 = vpop.f32.mrb[0].mxu0
    %879 = vmatprep.mubr.bf16.mxu0 %v486
    %880 = vmatmul.mubr.bf16.gmra.mrb[0].mxu0 %v485
    %v881 = vpop.f32.mrb[0].mxu0
    %v882 = vadd.f32 0.0, %v881
    %v883 = vpop.f32.mrb[0].mxu0
    %v884 = vpop.f32.mrb[0].mxu0
    %v885 = vadd.f32 0.0, %v884
    %v886 = vpop.f32.mrb[0].mxu0
    %887 = vmatprep.mubr.bf16.mxu0 %v488
    %888 = vmatmul.mubr.bf16.gmra.mrb[0].mxu0 %v487
    %v889 = vpop.f32.mrb[0].mxu0
    %v890 = vadd.f32 0.0, %v889
    %v891 = vpop.f32.mrb[0].mxu0
    %v892 = vpop.f32.mrb[0].mxu0
    %v893 = vadd.f32 0.0, %v892
    %v894 = vpop.f32.mrb[0].mxu0
    %895 = vmatprep.mubr.bf16.mxu0 %v490
    %896 = vmatmul.mubr.bf16.gmra.mrb[0].mxu0 %v489
    %v897 = vpop.f32.mrb[0].mxu0
    %v898 = vadd.f32 0.0, %v897
    %v899 = vpop.f32.mrb[0].mxu0
    %v900 = vpop.f32.mrb[0].mxu0
    %v901 = vadd.f32 0.0, %v900
    %v902 = vpop.f32.mrb[0].mxu0
    %903 = vmatprep.mubr.bf16.mxu0 %v492
    %904 = vmatmul.mubr.bf16.gmra.mrb[0].mxu0 %v491
    %v905 = vpop.f32.mrb[0].mxu0
    %v906 = vadd.f32 0.0, %v905
    %v907 = vpop.f32.mrb[0].mxu0
    %v908 = vpop.f32.mrb[0].mxu0
    %v909 = vadd.f32 0.0, %v908
    %v910 = vpop.f32.mrb[0].mxu0
    %911 = vmatprep.mubr.bf16.mxu0 %v494
    %912 = vmatmul.mubr.bf16.gmra.mrb[0].mxu0 %v493
    %v913 = vpop.f32.mrb[0].mxu0
    %v914 = vadd.f32 0.0, %v913
    %v915 = vpop.f32.mrb[0].mxu0
    %v916 = vpop.f32.mrb[0].mxu0
    %v917 = vadd.f32 0.0, %v916
    %v918 = vpop.f32.mrb[0].mxu0
    %919 = vmatprep.mubr.bf16.mxu0 %v496
    %920 = vmatmul.mubr.bf16.gmra.mrb[0].mxu0 %v495
    %v921 = vpop.f32.mrb[0].mxu0
    %v922 = vadd.f32 0.0, %v921
    %v923 = vpop.f32.mrb[0].mxu0
    %v924 = vpop.f32.mrb[0].mxu0
    %v925 = vadd.f32 0.0, %v924
    %v926 = vpop.f32.mrb[0].mxu0
    %927 = vmatprep.mubr.bf16.mxu0 %v498
    %928 = vmatmul.mubr.bf16.gmra.mrb[0].mxu0 %v497
    %v929 = vpop.f32.mrb[0].mxu0
    %v930 = vadd.f32 0.0, %v929
    %v931 = vpop.f32.mrb[0].mxu0
    %v932 = vpop.f32.mrb[0].mxu0
    %v933 = vadd.f32 0.0, %v932
    %v934 = vpop.f32.mrb[0].mxu0
    %935 = vmatprep.mubr.bf16.mxu0 %v500
    %936 = vmatmul.mubr.bf16.gmra.mrb[0].mxu0 %v499
    %v937 = vpop.f32.mrb[0].mxu0
    %v938 = vadd.f32 0.0, %v937
    %v939 = vpop.f32.mrb[0].mxu0
    %v940 = vpop.f32.mrb[0].mxu0
    %v941 = vadd.f32 0.0, %v940
    %v942 = vpop.f32.mrb[0].mxu0
    %943 = vmatprep.mubr.bf16.mxu0 %v502
    %944 = vmatmul.mubr.bf16.gmra.mrb[0].mxu0 %v501
    %v945 = vpop.f32.mrb[0].mxu0
    %v946 = vadd.f32 0.0, %v945
    %v947 = vpop.f32.mrb[0].mxu0
    %v948 = vpop.f32.mrb[0].mxu0
    %v949 = vadd.f32 0.0, %v948
    %v950 = vpop.f32.mrb[0].mxu0
    %951 = vdwg.mxu0
    %v952 = vadd.f32 %v87, %v698
    %v953 = vadd.f32 %v88, %v701
    %v954 = vadd.f32 %v89, %v706
    %v955 = vadd.f32 %v90, %v709
    %v956 = vadd.f32 %v91, %v714
    %v957 = vadd.f32 %v92, %v717
    %v958 = vadd.f32 %v93, %v722
    %v959 = vadd.f32 %v94, %v725
    %v960 = vadd.f32 %v95, %v730
    %v961 = vadd.f32 %v96, %v733
    %v962 = vadd.f32 %v97, %v738
    %v963 = vadd.f32 %v98, %v741
    %v964 = vadd.f32 %v99, %v746
    %v965 = vadd.f32 %v100, %v749
    %v966 = vadd.f32 %v101, %v754
    %v967 = vadd.f32 %v102, %v757
    %v968 = vadd.f32 %v103, %v762
    %v969 = vadd.f32 %v104, %v765
    %v970 = vadd.f32 %v105, %v770
    %v971 = vadd.f32 %v106, %v773
    %v972 = vadd.f32 %v107, %v778
    %v973 = vadd.f32 %v108, %v781
    %v974 = vadd.f32 %v109, %v786
    %v975 = vadd.f32 %v110, %v789
    %v976 = vadd.f32 %v111, %v794
    %v977 = vadd.f32 %v112, %v797
    %v978 = vadd.f32 %v113, %v802
    %v979 = vadd.f32 %v114, %v805
    %v980 = vadd.f32 %v115, %v810
    %v981 = vadd.f32 %v116, %v813
    %v982 = vadd.f32 %v117, %v818
    %v983 = vadd.f32 %v118, %v821
    %v984 = vadd.f32 %v119, %v826
    %v985 = vadd.f32 %v120, %v829
    %v986 = vadd.f32 %v121, %v834
    %v987 = vadd.f32 %v122, %v837
    %v988 = vadd.f32 %v123, %v842
    %v989 = vadd.f32 %v124, %v845
    %v990 = vadd.f32 %v125, %v850
    %v991 = vadd.f32 %v126, %v853
    %v992 = vadd.f32 %v127, %v858
    %v993 = vadd.f32 %v128, %v861
    %v994 = vadd.f32 %v129, %v866
    %v995 = vadd.f32 %v130, %v869
    %v996 = vadd.f32 %v131, %v874
    %v997 = vadd.f32 %v132, %v877
    %v998 = vadd.f32 %v133, %v882
    %v999 = vadd.f32 %v134, %v885
    %v1000 = vadd.f32 %v135, %v890
    %v1001 = vadd.f32 %v136, %v893
    %v1002 = vadd.f32 %v137, %v898
    %v1003 = vadd.f32 %v138, %v901
    %v1004 = vadd.f32 %v139, %v906
    %v1005 = vadd.f32 %v140, %v909
    %v1006 = vadd.f32 %v141, %v914
    %v1007 = vadd.f32 %v142, %v917
    %v1008 = vadd.f32 %v143, %v922
    %v1009 = vadd.f32 %v144, %v925
    %v1010 = vadd.f32 %v145, %v930
    %v1011 = vadd.f32 %v146, %v933
    %v1012 = vadd.f32 %v147, %v938
    %v1013 = vadd.f32 %v148, %v941
    %v1014 = vadd.f32 %v149, %v946
    %v1015 = vadd.f32 %v150, %v949
    %1016 = vst [vmem:[#allocation2] sm:$0xff] %v952
    %1017 = vst [vmem:[#allocation2 + $0x8] sm:$0xff] %v953
    %1018 = vst [vmem:[#allocation2 + $0x10] sm:$0xff] %v954
    %1019 = vst [vmem:[#allocation2 + $0x18] sm:$0xff] %v955
    %1020 = vst [vmem:[#allocation2 + $0x20] sm:$0xff] %v956
    %1021 = vst [vmem:[#allocation2 + $0x28] sm:$0xff] %v957
    %1022 = vst [vmem:[#allocation2 + $0x30] sm:$0xff] %v958
    %1023 = vst [vmem:[#allocation2 + $0x38] sm:$0xff] %v959
    %1024 = vst [vmem:[#allocation2 + $0x40] sm:$0xff] %v960
    %1025 = vst [vmem:[#allocation2 + $0x48] sm:$0xff] %v961
    %1026 = vst [vmem:[#allocation2 + $0x50] sm:$0xff] %v962
    %1027 = vst [vmem:[#allocation2 + $0x58] sm:$0xff] %v963
    %1028 = vst [vmem:[#allocation2 + $0x60] sm:$0xff] %v964
    %1029 = vst [vmem:[#allocation2 + $0x68] sm:$0xff] %v965
    %1030 = vst [vmem:[#allocation2 + $0x70] sm:$0xff] %v966
    %1031 = vst [vmem:[#allocation2 + $0x78] sm:$0xff] %v967
    %1032 = vst [vmem:[#allocation2 + $0x80] sm:$0xff] %v968
    %1033 = vst [vmem:[#allocation2 + $0x88] sm:$0xff] %v969
    %1034 = vst [vmem:[#allocation2 + $0x90] sm:$0xff] %v970
    %1035 = vst [vmem:[#allocation2 + $0x98] sm:$0xff] %v971
    %1036 = vst [vmem:[#allocation2 + $0xa0] sm:$0xff] %v972
    %1037 = vst [vmem:[#allocation2 + $0xa8] sm:$0xff] %v973
    %1038 = vst [vmem:[#allocation2 + $0xb0] sm:$0xff] %v974
    %1039 = vst [vmem:[#allocation2 + $0xb8] sm:$0xff] %v975
    %1040 = vst [vmem:[#allocation2 + $0xc0] sm:$0xff] %v976
    %1041 = vst [vmem:[#allocation2 + $0xc8] sm:$0xff] %v977
    %1042 = vst [vmem:[#allocation2 + $0xd0] sm:$0xff] %v978
    %1043 = vst [vmem:[#allocation2 + $0xd8] sm:$0xff] %v979
    %1044 = vst [vmem:[#allocation2 + $0xe0] sm:$0xff] %v980
    %1045 = vst [vmem:[#allocation2 + $0xe8] sm:$0xff] %v981
    %1046 = vst [vmem:[#allocation2 + $0xf0] sm:$0xff] %v982
    %1047 = vst [vmem:[#allocation2 + $0xf8] sm:$0xff] %v983
    %1048 = vst [vmem:[#allocation2 + $0x100] sm:$0xff] %v984
    %1049 = vst [vmem:[#allocation2 + $0x108] sm:$0xff] %v985
    %1050 = vst [vmem:[#allocation2 + $0x110] sm:$0xff] %v986
    %1051 = vst [vmem:[#allocation2 + $0x118] sm:$0xff] %v987
    %1052 = vst [vmem:[#allocation2 + $0x120] sm:$0xff] %v988
    %1053 = vst [vmem:[#allocation2 + $0x128] sm:$0xff] %v989
    %1054 = vst [vmem:[#allocation2 + $0x130] sm:$0xff] %v990
    %1055 = vst [vmem:[#allocation2 + $0x138] sm:$0xff] %v991
    %1056 = vst [vmem:[#allocation2 + $0x140] sm:$0xff] %v992
    %1057 = vst [vmem:[#allocation2 + $0x148] sm:$0xff] %v993
    %1058 = vst [vmem:[#allocation2 + $0x150] sm:$0xff] %v994
    %1059 = vst [vmem:[#allocation2 + $0x158] sm:$0xff] %v995
    %1060 = vst [vmem:[#allocation2 + $0x160] sm:$0xff] %v996
    %1061 = vst [vmem:[#allocation2 + $0x168] sm:$0xff] %v997
    %1062 = vst [vmem:[#allocation2 + $0x170] sm:$0xff] %v998
    %1063 = vst [vmem:[#allocation2 + $0x178] sm:$0xff] %v999
    %1064 = vst [vmem:[#allocation2 + $0x180] sm:$0xff] %v1000
    %1065 = vst [vmem:[#allocation2 + $0x188] sm:$0xff] %v1001
    %1066 = vst [vmem:[#allocation2 + $0x190] sm:$0xff] %v1002
    %1067 = vst [vmem:[#allocation2 + $0x198] sm:$0xff] %v1003
    %1068 = vst [vmem:[#allocation2 + $0x1a0] sm:$0xff] %v1004
    %1069 = vst [vmem:[#allocation2 + $0x1a8] sm:$0xff] %v1005
    %1070 = vst [vmem:[#allocation2 + $0x1b0] sm:$0xff] %v1006
    %1071 = vst [vmem:[#allocation2 + $0x1b8] sm:$0xff] %v1007
    %1072 = vst [vmem:[#allocation2 + $0x1c0] sm:$0xff] %v1008
    %1073 = vst [vmem:[#allocation2 + $0x1c8] sm:$0xff] %v1009
    %1074 = vst [vmem:[#allocation2 + $0x1d0] sm:$0xff] %v1010
    %1075 = vst [vmem:[#allocation2 + $0x1d8] sm:$0xff] %v1011
    %1076 = vst [vmem:[#allocation2 + $0x1e0] sm:$0xff] %v1012
    %1077 = vst [vmem:[#allocation2 + $0x1e8] sm:$0xff] %v1013
    %1078 = vst [vmem:[#allocation2 + $0x1f0] sm:$0xff] %v1014
    %1079 = vst [vmem:[#allocation2 + $0x1f8] sm:$0xff] %v1015
    // Predicated region
    $region22: #{f.1} parent=1 // pred_check
      %p1080 = pneg %p19
    $region23: #{f.1} parent=1 // pred_check_branch
      %1082 = sbr.rel (%p1080) target = $region25
    $region24: #{f.1} parent=1 // pred_region
      %v1083 = vld [vmem:[#allocation2] sm:$0xff]
      %v1084 = vld [vmem:[#allocation2 + $0x8] sm:$0xff]
      %v1085 = vld [vmem:[#allocation2 + $0x10] sm:$0xff]
      %v1086 = vld [vmem:[#allocation2 + $0x18] sm:$0xff]
      %v1087 = vld [vmem:[#allocation2 + $0x20] sm:$0xff]
      %v1088 = vld [vmem:[#allocation2 + $0x28] sm:$0xff]
      %v1089 = vld [vmem:[#allocation2 + $0x30] sm:$0xff]
      %v1090 = vld [vmem:[#allocation2 + $0x38] sm:$0xff]
      %v1091 = vld [vmem:[#allocation2 + $0x40] sm:$0xff]
      %v1092 = vld [vmem:[#allocation2 + $0x48] sm:$0xff]
      %v1093 = vld [vmem:[#allocation2 + $0x50] sm:$0xff]
      %v1094 = vld [vmem:[#allocation2 + $0x58] sm:$0xff]
      %v1095 = vld [vmem:[#allocation2 + $0x60] sm:$0xff]
      %v1096 = vld [vmem:[#allocation2 + $0x68] sm:$0xff]
      %v1097 = vld [vmem:[#allocation2 + $0x70] sm:$0xff]
      %v1098 = vld [vmem:[#allocation2 + $0x78] sm:$0xff]
      %v1099 = vld [vmem:[#allocation2 + $0x80] sm:$0xff]
      %v1100 = vld [vmem:[#allocation2 + $0x88] sm:$0xff]
      %v1101 = vld [vmem:[#allocation2 + $0x90] sm:$0xff]
      %v1102 = vld [vmem:[#allocation2 + $0x98] sm:$0xff]
      %v1103 = vld [vmem:[#allocation2 + $0xa0] sm:$0xff]
      %v1104 = vld [vmem:[#allocation2 + $0xa8] sm:$0xff]
      %v1105 = vld [vmem:[#allocation2 + $0xb0] sm:$0xff]
      %v1106 = vld [vmem:[#allocation2 + $0xb8] sm:$0xff]
      %v1107 = vld [vmem:[#allocation2 + $0xc0] sm:$0xff]
      %v1108 = vld [vmem:[#allocation2 + $0xc8] sm:$0xff]
      %v1109 = vld [vmem:[#allocation2 + $0xd0] sm:$0xff]
      %v1110 = vld [vmem:[#allocation2 + $0xd8] sm:$0xff]
      %v1111 = vld [vmem:[#allocation2 + $0xe0] sm:$0xff]
      %v1112 = vld [vmem:[#allocation2 + $0xe8] sm:$0xff]
      %v1113 = vld [vmem:[#allocation2 + $0xf0] sm:$0xff]
      %v1114 = vld [vmem:[#allocation2 + $0xf8] sm:$0xff]
      %v1115 = vld [vmem:[#allocation2 + $0x100] sm:$0xff]
      %v1116 = vld [vmem:[#allocation2 + $0x108] sm:$0xff]
      %v1117 = vld [vmem:[#allocation2 + $0x110] sm:$0xff]
      %v1118 = vld [vmem:[#allocation2 + $0x118] sm:$0xff]
      %v1119 = vld [vmem:[#allocation2 + $0x120] sm:$0xff]
      %v1120 = vld [vmem:[#allocation2 + $0x128] sm:$0xff]
      %v1121 = vld [vmem:[#allocation2 + $0x130] sm:$0xff]
      %v1122 = vld [vmem:[#allocation2 + $0x138] sm:$0xff]
      %v1123 = vld [vmem:[#allocation2 + $0x140] sm:$0xff]
      %v1124 = vld [vmem:[#allocation2 + $0x148] sm:$0xff]
      %v1125 = vld [vmem:[#allocation2 + $0x150] sm:$0xff]
      %v1126 = vld [vmem:[#allocation2 + $0x158] sm:$0xff]
      %v1127 = vld [vmem:[#allocation2 + $0x160] sm:$0xff]
      %v1128 = vld [vmem:[#allocation2 + $0x168] sm:$0xff]
      %v1129 = vld [vmem:[#allocation2 + $0x170] sm:$0xff]
      %v1130 = vld [vmem:[#allocation2 + $0x178] sm:$0xff]
      %v1131 = vld [vmem:[#allocation2 + $0x180] sm:$0xff]
      %v1132 = vld [vmem:[#allocation2 + $0x188] sm:$0xff]
      %v1133 = vld [vmem:[#allocation2 + $0x190] sm:$0xff]
      %v1134 = vld [vmem:[#allocation2 + $0x198] sm:$0xff]
      %v1135 = vld [vmem:[#allocation2 + $0x1a0] sm:$0xff]
      %v1136 = vld [vmem:[#allocation2 + $0x1a8] sm:$0xff]
      %v1137 = vld [vmem:[#allocation2 + $0x1b0] sm:$0xff]
      %v1138 = vld [vmem:[#allocation2 + $0x1b8] sm:$0xff]
      %v1139 = vld [vmem:[#allocation2 + $0x1c0] sm:$0xff]
      %v1140 = vld [vmem:[#allocation2 + $0x1c8] sm:$0xff]
      %v1141 = vld [vmem:[#allocation2 + $0x1d0] sm:$0xff]
      %v1142 = vld [vmem:[#allocation2 + $0x1d8] sm:$0xff]
      %v1143 = vld [vmem:[#allocation2 + $0x1e0] sm:$0xff]
      %v1144 = vld [vmem:[#allocation2 + $0x1e8] sm:$0xff]
      %v1145 = vld [vmem:[#allocation2 + $0x1f0] sm:$0xff]
      %v1146 = vld [vmem:[#allocation2 + $0x1f8] sm:$0xff]
      %v1147 = vadd.f32 %v1083, %v1084
      %v1148 = vadd.f32 %v1147, %v1085
      %v1149 = vadd.f32 %v1148, %v1086
      %v1150 = vadd.f32 %v1149, %v1087
      %v1151 = vadd.f32 %v1150, %v1088
      %v1152 = vadd.f32 %v1151, %v1089
      %v1153 = vadd.f32 %v1152, %v1090
      %v1154 = vadd.f32 %v1153, %v1091
      %v1155 = vadd.f32 %v1154, %v1092
      %v1156 = vadd.f32 %v1155, %v1093
      %v1157 = vadd.f32 %v1156, %v1094
      %v1158 = vadd.f32 %v1157, %v1095
      %v1159 = vadd.f32 %v1158, %v1096
      %v1160 = vadd.f32 %v1159, %v1097
      %v1161 = vadd.f32 %v1160, %v1098
      %v1162 = vadd.f32 %v1161, %v1099
      %v1163 = vadd.f32 %v1162, %v1100
      %v1164 = vadd.f32 %v1163, %v1101
      %v1165 = vadd.f32 %v1164, %v1102
      %v1166 = vadd.f32 %v1165, %v1103
      %v1167 = vadd.f32 %v1166, %v1104
      %v1168 = vadd.f32 %v1167, %v1105
      %v1169 = vadd.f32 %v1168, %v1106
      %v1170 = vadd.f32 %v1169, %v1107
      %v1171 = vadd.f32 %v1170, %v1108
      %v1172 = vadd.f32 %v1171, %v1109
      %v1173 = vadd.f32 %v1172, %v1110
      %v1174 = vadd.f32 %v1173, %v1111
      %v1175 = vadd.f32 %v1174, %v1112
      %v1176 = vadd.f32 %v1175, %v1113
      %v1177 = vadd.f32 %v1176, %v1114
      %v1178 = vadd.f32 %v1177, %v1115
      %v1179 = vadd.f32 %v1178, %v1116
      %v1180 = vadd.f32 %v1179, %v1117
      %v1181 = vadd.f32 %v1180, %v1118
      %v1182 = vadd.f32 %v1181, %v1119
      %v1183 = vadd.f32 %v1182, %v1120
      %v1184 = vadd.f32 %v1183, %v1121
      %v1185 = vadd.f32 %v1184, %v1122
      %v1186 = vadd.f32 %v1185, %v1123
      %v1187 = vadd.f32 %v1186, %v1124
      %v1188 = vadd.f32 %v1187, %v1125
      %v1189 = vadd.f32 %v1188, %v1126
      %v1190 = vadd.f32 %v1189, %v1127
      %v1191 = vadd.f32 %v1190, %v1128
      %v1192 = vadd.f32 %v1191, %v1129
      %v1193 = vadd.f32 %v1192, %v1130
      %v1194 = vadd.f32 %v1193, %v1131
      %v1195 = vadd.f32 %v1194, %v1132
      %v1196 = vadd.f32 %v1195, %v1133
      %v1197 = vadd.f32 %v1196, %v1134
      %v1198 = vadd.f32 %v1197, %v1135
      %v1199 = vadd.f32 %v1198, %v1136
      %v1200 = vadd.f32 %v1199, %v1137
      %v1201 = vadd.f32 %v1200, %v1138
      %v1202 = vadd.f32 %v1201, %v1139
      %v1203 = vadd.f32 %v1202, %v1140
      %v1204 = vadd.f32 %v1203, %v1141
      %v1205 = vadd.f32 %v1204, %v1142
      %v1206 = vadd.f32 %v1205, %v1143
      %v1207 = vadd.f32 %v1206, %v1144
      %v1208 = vadd.f32 %v1207, %v1145
      %v1209 = vadd.f32 %v1208, %v1146
      %v1210 = vrot.slane %v1209, 4
      %v1211 = vadd.f32 %v1209, %v1210
      %v1212 = vrot.slane %v1211, 2
      %v1213 = vadd.f32 %v1211, %v1212
      %v1214 = vrot.slane %v1213, 1
      %v1215 = vadd.f32 %v1213, %v1214
      %v1216 = vmul.f32 %v1215, 0.001953125
      %v1217 = vsub.f32 %v1083, %v1216
      %v1218 = vsub.f32 %v1084, %v1216
      %v1219 = vsub.f32 %v1085, %v1216
      %v1220 = vsub.f32 %v1086, %v1216
      %v1221 = vsub.f32 %v1087, %v1216
      %v1222 = vsub.f32 %v1088, %v1216
      %v1223 = vsub.f32 %v1089, %v1216
      %v1224 = vsub.f32 %v1090, %v1216
      %v1225 = vsub.f32 %v1091, %v1216
      %v1226 = vsub.f32 %v1092, %v1216
      %v1227 = vsub.f32 %v1093, %v1216
      %v1228 = vsub.f32 %v1094, %v1216
      %v1229 = vsub.f32 %v1095, %v1216
      %v1230 = vsub.f32 %v1096, %v1216
      %v1231 = vsub.f32 %v1097, %v1216
      %v1232 = vsub.f32 %v1098, %v1216
      %v1233 = vsub.f32 %v1099, %v1216
      %v1234 = vsub.f32 %v1100, %v1216
      %v1235 = vsub.f32 %v1101, %v1216
      %v1236 = vsub.f32 %v1102, %v1216
      %v1237 = vsub.f32 %v1103, %v1216
      %v1238 = vsub.f32 %v1104, %v1216
      %v1239 = vsub.f32 %v1105, %v1216
      %v1240 = vsub.f32 %v1106, %v1216
      %v1241 = vsub.f32 %v1107, %v1216
      %v1242 = vsub.f32 %v1108, %v1216
      %v1243 = vsub.f32 %v1109, %v1216
      %v1244 = vsub.f32 %v1110, %v1216
      %v1245 = vsub.f32 %v1111, %v1216
      %v1246 = vsub.f32 %v1112, %v1216
      %v1247 = vsub.f32 %v1113, %v1216
      %v1248 = vsub.f32 %v1114, %v1216
      %v1249 = vsub.f32 %v1115, %v1216
      %v1250 = vsub.f32 %v1116, %v1216
      %v1251 = vsub.f32 %v1117, %v1216
      %v1252 = vsub.f32 %v1118, %v1216
      %v1253 = vsub.f32 %v1119, %v1216
      %v1254 = vsub.f32 %v1120, %v1216
      %v1255 = vsub.f32 %v1121, %v1216
      %v1256 = vsub.f32 %v1122, %v1216
      %v1257 = vsub.f32 %v1123, %v1216
      %v1258 = vsub.f32 %v1124, %v1216
      %v1259 = vsub.f32 %v1125, %v1216
      %v1260 = vsub.f32 %v1126, %v1216
      %v1261 = vsub.f32 %v1127, %v1216
      %v1262 = vsub.f32 %v1128, %v1216
      %v1263 = vsub.f32 %v1129, %v1216
      %v1264 = vsub.f32 %v1130, %v1216
      %v1265 = vsub.f32 %v1131, %v1216
      %v1266 = vsub.f32 %v1132, %v1216
      %v1267 = vsub.f32 %v1133, %v1216
      %v1268 = vsub.f32 %v1134, %v1216
      %v1269 = vsub.f32 %v1135, %v1216
      %v1270 = vsub.f32 %v1136, %v1216
      %v1271 = vsub.f32 %v1137, %v1216
      %v1272 = vsub.f32 %v1138, %v1216
      %v1273 = vsub.f32 %v1139, %v1216
      %v1274 = vsub.f32 %v1140, %v1216
      %v1275 = vsub.f32 %v1141, %v1216
      %v1276 = vsub.f32 %v1142, %v1216
      %v1277 = vsub.f32 %v1143, %v1216
      %v1278 = vsub.f32 %v1144, %v1216
      %v1279 = vsub.f32 %v1145, %v1216
      %v1280 = vsub.f32 %v1146, %v1216
      %v1281 = vmul.f32 %v1217, %v1217
      %v1282 = vmul.f32 %v1218, %v1218
      %v1283 = vmul.f32 %v1219, %v1219
      %v1284 = vmul.f32 %v1220, %v1220
      %v1285 = vmul.f32 %v1221, %v1221
      %v1286 = vmul.f32 %v1222, %v1222
      %v1287 = vmul.f32 %v1223, %v1223
      %v1288 = vmul.f32 %v1224, %v1224
      %v1289 = vmul.f32 %v1225, %v1225
      %v1290 = vmul.f32 %v1226, %v1226
      %v1291 = vmul.f32 %v1227, %v1227
      %v1292 = vmul.f32 %v1228, %v1228
      %v1293 = vmul.f32 %v1229, %v1229
      %v1294 = vmul.f32 %v1230, %v1230
      %v1295 = vmul.f32 %v1231, %v1231
      %v1296 = vmul.f32 %v1232, %v1232
      %v1297 = vmul.f32 %v1233, %v1233
      %v1298 = vmul.f32 %v1234, %v1234
      %v1299 = vmul.f32 %v1235, %v1235
      %v1300 = vmul.f32 %v1236, %v1236
      %v1301 = vmul.f32 %v1237, %v1237
      %v1302 = vmul.f32 %v1238, %v1238
      %v1303 = vmul.f32 %v1239, %v1239
      %v1304 = vmul.f32 %v1240, %v1240
      %v1305 = vmul.f32 %v1241, %v1241
      %v1306 = vmul.f32 %v1242, %v1242
      %v1307 = vmul.f32 %v1243, %v1243
      %v1308 = vmul.f32 %v1244, %v1244
      %v1309 = vmul.f32 %v1245, %v1245
      %v1310 = vmul.f32 %v1246, %v1246
      %v1311 = vmul.f32 %v1247, %v1247
      %v1312 = vmul.f32 %v1248, %v1248
      %v1313 = vmul.f32 %v1249, %v1249
      %v1314 = vmul.f32 %v1250, %v1250
      %v1315 = vmul.f32 %v1251, %v1251
      %v1316 = vmul.f32 %v1252, %v1252
      %v1317 = vmul.f32 %v1253, %v1253
      %v1318 = vmul.f32 %v1254, %v1254
      %v1319 = vmul.f32 %v1255, %v1255
      %v1320 = vmul.f32 %v1256, %v1256
      %v1321 = vmul.f32 %v1257, %v1257
      %v1322 = vmul.f32 %v1258, %v1258
      %v1323 = vmul.f32 %v1259, %v1259
      %v1324 = vmul.f32 %v1260, %v1260
      %v1325 = vmul.f32 %v1261, %v1261
      %v1326 = vmul.f32 %v1262, %v1262
      %v1327 = vmul.f32 %v1263, %v1263
      %v1328 = vmul.f32 %v1264, %v1264
      %v1329 = vmul.f32 %v1265, %v1265
      %v1330 = vmul.f32 %v1266, %v1266
      %v1331 = vmul.f32 %v1267, %v1267
      %v1332 = vmul.f32 %v1268, %v1268
      %v1333 = vmul.f32 %v1269, %v1269
      %v1334 = vmul.f32 %v1270, %v1270
      %v1335 = vmul.f32 %v1271, %v1271
      %v1336 = vmul.f32 %v1272, %v1272
      %v1337 = vmul.f32 %v1273, %v1273
      %v1338 = vmul.f32 %v1274, %v1274
      %v1339 = vmul.f32 %v1275, %v1275
      %v1340 = vmul.f32 %v1276, %v1276
      %v1341 = vmul.f32 %v1277, %v1277
      %v1342 = vmul.f32 %v1278, %v1278
      %v1343 = vmul.f32 %v1279, %v1279
      %v1344 = vmul.f32 %v1280, %v1280
      %v1345 = vadd.f32 %v1281, %v1282
      %v1346 = vadd.f32 %v1345, %v1283
      %v1347 = vadd.f32 %v1346, %v1284
      %v1348 = vadd.f32 %v1347, %v1285
      %v1349 = vadd.f32 %v1348, %v1286
      %v1350 = vadd.f32 %v1349, %v1287
      %v1351 = vadd.f32 %v1350, %v1288
      %v1352 = vadd.f32 %v1351, %v1289
      %v1353 = vadd.f32 %v1352, %v1290
      %v1354 = vadd.f32 %v1353, %v1291
      %v1355 = vadd.f32 %v1354, %v1292
      %v1356 = vadd.f32 %v1355, %v1293
      %v1357 = vadd.f32 %v1356, %v1294
      %v1358 = vadd.f32 %v1357, %v1295
      %v1359 = vadd.f32 %v1358, %v1296
      %v1360 = vadd.f32 %v1359, %v1297
      %v1361 = vadd.f32 %v1360, %v1298
      %v1362 = vadd.f32 %v1361, %v1299
      %v1363 = vadd.f32 %v1362, %v1300
      %v1364 = vadd.f32 %v1363, %v1301
      %v1365 = vadd.f32 %v1364, %v1302
      %v1366 = vadd.f32 %v1365, %v1303
      %v1367 = vadd.f32 %v1366, %v1304
      %v1368 = vadd.f32 %v1367, %v1305
      %v1369 = vadd.f32 %v1368, %v1306
      %v1370 = vadd.f32 %v1369, %v1307
      %v1371 = vadd.f32 %v1370, %v1308
      %v1372 = vadd.f32 %v1371, %v1309
      %v1373 = vadd.f32 %v1372, %v1310
      %v1374 = vadd.f32 %v1373, %v1311
      %v1375 = vadd.f32 %v1374, %v1312
      %v1376 = vadd.f32 %v1375, %v1313
      %v1377 = vadd.f32 %v1376, %v1314
      %v1378 = vadd.f32 %v1377, %v1315
      %v1379 = vadd.f32 %v1378, %v1316
      %v1380 = vadd.f32 %v1379, %v1317
      %v1381 = vadd.f32 %v1380, %v1318
      %v1382 = vadd.f32 %v1381, %v1319
      %v1383 = vadd.f32 %v1382, %v1320
      %v1384 = vadd.f32 %v1383, %v1321
      %v1385 = vadd.f32 %v1384, %v1322
      %v1386 = vadd.f32 %v1385, %v1323
      %v1387 = vadd.f32 %v1386, %v1324
      %v1388 = vadd.f32 %v1387, %v1325
      %v1389 = vadd.f32 %v1388, %v1326
      %v1390 = vadd.f32 %v1389, %v1327
      %v1391 = vadd.f32 %v1390, %v1328
      %v1392 = vadd.f32 %v1391, %v1329
      %v1393 = vadd.f32 %v1392, %v1330
      %v1394 = vadd.f32 %v1393, %v1331
      %v1395 = vadd.f32 %v1394, %v1332
      %v1396 = vadd.f32 %v1395, %v1333
      %v1397 = vadd.f32 %v1396, %v1334
      %v1398 = vadd.f32 %v1397, %v1335
      %v1399 = vadd.f32 %v1398, %v1336
      %v1400 = vadd.f32 %v1399, %v1337
      %v1401 = vadd.f32 %v1400, %v1338
      %v1402 = vadd.f32 %v1401, %v1339
      %v1403 = vadd.f32 %v1402, %v1340
      %v1404 = vadd.f32 %v1403, %v1341
      %v1405 = vadd.f32 %v1404, %v1342
      %v1406 = vadd.f32 %v1405, %v1343
      %v1407 = vadd.f32 %v1406, %v1344
      %v1408 = vrot.slane %v1407, 4
      %v1409 = vadd.f32 %v1407, %v1408
      %v1410 = vrot.slane %v1409, 2
      %v1411 = vadd.f32 %v1409, %v1410
      %v1412 = vrot.slane %v1411, 1
      %v1413 = vadd.f32 %v1411, %v1412
      %v1414 = vmul.f32 %v1413, 0.001953125
      %v1415 = vadd.f32 %v1414, 1e-05
      %v1416 = vrsqrt.pop %v1415
      %v1417 = vmul.f32 %v1217, %v1416
      %v1418 = vmul.f32 %v1218, %v1416
      %v1419 = vmul.f32 %v1219, %v1416
      %v1420 = vmul.f32 %v1220, %v1416
      %v1421 = vmul.f32 %v1221, %v1416
      %v1422 = vmul.f32 %v1222, %v1416
      %v1423 = vmul.f32 %v1223, %v1416
      %v1424 = vmul.f32 %v1224, %v1416
      %v1425 = vmul.f32 %v1225, %v1416
      %v1426 = vmul.f32 %v1226, %v1416
      %v1427 = vmul.f32 %v1227, %v1416
      %v1428 = vmul.f32 %v1228, %v1416
      %v1429 = vmul.f32 %v1229, %v1416
      %v1430 = vmul.f32 %v1230, %v1416
      %v1431 = vmul.f32 %v1231, %v1416
      %v1432 = vmul.f32 %v1232, %v1416
      %v1433 = vmul.f32 %v1233, %v1416
      %v1434 = vmul.f32 %v1234, %v1416
      %v1435 = vmul.f32 %v1235, %v1416
      %v1436 = vmul.f32 %v1236, %v1416
      %v1437 = vmul.f32 %v1237, %v1416
      %v1438 = vmul.f32 %v1238, %v1416
      %v1439 = vmul.f32 %v1239, %v1416
      %v1440 = vmul.f32 %v1240, %v1416
      %v1441 = vmul.f32 %v1241, %v1416
      %v1442 = vmul.f32 %v1242, %v1416
      %v1443 = vmul.f32 %v1243, %v1416
      %v1444 = vmul.f32 %v1244, %v1416
      %v1445 = vmul.f32 %v1245, %v1416
      %v1446 = vmul.f32 %v1246, %v1416
      %v1447 = vmul.f32 %v1247, %v1416
      %v1448 = vmul.f32 %v1248, %v1416
      %v1449 = vmul.f32 %v1249, %v1416
      %v1450 = vmul.f32 %v1250, %v1416
      %v1451 = vmul.f32 %v1251, %v1416
      %v1452 = vmul.f32 %v1252, %v1416
      %v1453 = vmul.f32 %v1253, %v1416
      %v1454 = vmul.f32 %v1254, %v1416
      %v1455 = vmul.f32 %v1255, %v1416
      %v1456 = vmul.f32 %v1256, %v1416
      %v1457 = vmul.f32 %v1257, %v1416
      %v1458 = vmul.f32 %v1258, %v1416
      %v1459 = vmul.f32 %v1259, %v1416
      %v1460 = vmul.f32 %v1260, %v1416
      %v1461 = vmul.f32 %v1261, %v1416
      %v1462 = vmul.f32 %v1262, %v1416
      %v1463 = vmul.f32 %v1263, %v1416
      %v1464 = vmul.f32 %v1264, %v1416
      %v1465 = vmul.f32 %v1265, %v1416
      %v1466 = vmul.f32 %v1266, %v1416
      %v1467 = vmul.f32 %v1267, %v1416
      %v1468 = vmul.f32 %v1268, %v1416
      %v1469 = vmul.f32 %v1269, %v1416
      %v1470 = vmul.f32 %v1270, %v1416
      %v1471 = vmul.f32 %v1271, %v1416
      %v1472 = vmul.f32 %v1272, %v1416
      %v1473 = vmul.f32 %v1273, %v1416
      %v1474 = vmul.f32 %v1274, %v1416
      %v1475 = vmul.f32 %v1275, %v1416
      %v1476 = vmul.f32 %v1276, %v1416
      %v1477 = vmul.f32 %v1277, %v1416
      %v1478 = vmul.f32 %v1278, %v1416
      %v1479 = vmul.f32 %v1279, %v1416
      %v1480 = vmul.f32 %v1280, %v1416
      %v1481 = vld [vmem:[%s2] sm:$0x1]
      %v1483 = vlaneseq
      %v1484 = vshrl.u32 %v1483, 7
      %v1485 = vsub.s32 0, %v1484
      %v1486 = vrot.slane %v1481, %v1485
      %v1488 = vmul.f32 %v1417, %v1486
      %v1489 = vmul.f32 %v1418, %v1486
      %v1490 = vmul.f32 %v1419, %v1486
      %v1491 = vmul.f32 %v1420, %v1486
      %v1492 = vmul.f32 %v1421, %v1486
      %v1493 = vmul.f32 %v1422, %v1486
      %v1494 = vmul.f32 %v1423, %v1486
      %v1495 = vmul.f32 %v1424, %v1486
      %v1496 = vmul.f32 %v1425, %v1486
      %v1497 = vmul.f32 %v1426, %v1486
      %v1498 = vmul.f32 %v1427, %v1486
      %v1499 = vmul.f32 %v1428, %v1486
      %v1500 = vmul.f32 %v1429, %v1486
      %v1501 = vmul.f32 %v1430, %v1486
      %v1502 = vmul.f32 %v1431, %v1486
      %v1503 = vmul.f32 %v1432, %v1486
      %v1504 = vmul.f32 %v1433, %v1486
      %v1505 = vmul.f32 %v1434, %v1486
      %v1506 = vmul.f32 %v1435, %v1486
      %v1507 = vmul.f32 %v1436, %v1486
      %v1508 = vmul.f32 %v1437, %v1486
      %v1509 = vmul.f32 %v1438, %v1486
      %v1510 = vmul.f32 %v1439, %v1486
      %v1511 = vmul.f32 %v1440, %v1486
      %v1512 = vmul.f32 %v1441, %v1486
      %v1513 = vmul.f32 %v1442, %v1486
      %v1514 = vmul.f32 %v1443, %v1486
      %v1515 = vmul.f32 %v1444, %v1486
      %v1516 = vmul.f32 %v1445, %v1486
      %v1517 = vmul.f32 %v1446, %v1486
      %v1518 = vmul.f32 %v1447, %v1486
      %v1519 = vmul.f32 %v1448, %v1486
      %v1520 = vmul.f32 %v1449, %v1486
      %v1521 = vmul.f32 %v1450, %v1486
      %v1522 = vmul.f32 %v1451, %v1486
      %v1523 = vmul.f32 %v1452, %v1486
      %v1524 = vmul.f32 %v1453, %v1486
      %v1525 = vmul.f32 %v1454, %v1486
      %v1526 = vmul.f32 %v1455, %v1486
      %v1527 = vmul.f32 %v1456, %v1486
      %v1528 = vmul.f32 %v1457, %v1486
      %v1529 = vmul.f32 %v1458, %v1486
      %v1530 = vmul.f32 %v1459, %v1486
      %v1531 = vmul.f32 %v1460, %v1486
      %v1532 = vmul.f32 %v1461, %v1486
      %v1533 = vmul.f32 %v1462, %v1486
      %v1534 = vmul.f32 %v1463, %v1486
      %v1535 = vmul.f32 %v1464, %v1486
      %v1536 = vmul.f32 %v1465, %v1486
      %v1537 = vmul.f32 %v1466, %v1486
      %v1538 = vmul.f32 %v1467, %v1486
      %v1539 = vmul.f32 %v1468, %v1486
      %v1540 = vmul.f32 %v1469, %v1486
      %v1541 = vmul.f32 %v1470, %v1486
      %v1542 = vmul.f32 %v1471, %v1486
      %v1543 = vmul.f32 %v1472, %v1486
      %v1544 = vmul.f32 %v1473, %v1486
      %v1545 = vmul.f32 %v1474, %v1486
      %v1546 = vmul.f32 %v1475, %v1486
      %v1547 = vmul.f32 %v1476, %v1486
      %v1548 = vmul.f32 %v1477, %v1486
      %v1549 = vmul.f32 %v1478, %v1486
      %v1550 = vmul.f32 %v1479, %v1486
      %v1551 = vmul.f32 %v1480, %v1486
      %v1552 = vld [vmem:[%s3] sm:$0x1]
      %v1554 = vlaneseq
      %v1555 = vshrl.u32 %v1554, 7
      %v1556 = vsub.s32 0, %v1555
      %v1557 = vrot.slane %v1552, %v1556
      %v1559 = vadd.f32 %v1488, %v1557
      %v1560 = vadd.f32 %v1489, %v1557
      %v1561 = vadd.f32 %v1490, %v1557
      %v1562 = vadd.f32 %v1491, %v1557
      %v1563 = vadd.f32 %v1492, %v1557
      %v1564 = vadd.f32 %v1493, %v1557
      %v1565 = vadd.f32 %v1494, %v1557
      %v1566 = vadd.f32 %v1495, %v1557
      %v1567 = vadd.f32 %v1496, %v1557
      %v1568 = vadd.f32 %v1497, %v1557
      %v1569 = vadd.f32 %v1498, %v1557
      %v1570 = vadd.f32 %v1499, %v1557
      %v1571 = vadd.f32 %v1500, %v1557
      %v1572 = vadd.f32 %v1501, %v1557
      %v1573 = vadd.f32 %v1502, %v1557
      %v1574 = vadd.f32 %v1503, %v1557
      %v1575 = vadd.f32 %v1504, %v1557
      %v1576 = vadd.f32 %v1505, %v1557
      %v1577 = vadd.f32 %v1506, %v1557
      %v1578 = vadd.f32 %v1507, %v1557
      %v1579 = vadd.f32 %v1508, %v1557
      %v1580 = vadd.f32 %v1509, %v1557
      %v1581 = vadd.f32 %v1510, %v1557
      %v1582 = vadd.f32 %v1511, %v1557
      %v1583 = vadd.f32 %v1512, %v1557
      %v1584 = vadd.f32 %v1513, %v1557
      %v1585 = vadd.f32 %v1514, %v1557
      %v1586 = vadd.f32 %v1515, %v1557
      %v1587 = vadd.f32 %v1516, %v1557
      %v1588 = vadd.f32 %v1517, %v1557
      %v1589 = vadd.f32 %v1518, %v1557
      %v1590 = vadd.f32 %v1519, %v1557
      %v1591 = vadd.f32 %v1520, %v1557
      %v1592 = vadd.f32 %v1521, %v1557
      %v1593 = vadd.f32 %v1522, %v1557
      %v1594 = vadd.f32 %v1523, %v1557
      %v1595 = vadd.f32 %v1524, %v1557
      %v1596 = vadd.f32 %v1525, %v1557
      %v1597 = vadd.f32 %v1526, %v1557
      %v1598 = vadd.f32 %v1527, %v1557
      %v1599 = vadd.f32 %v1528, %v1557
      %v1600 = vadd.f32 %v1529, %v1557
      %v1601 = vadd.f32 %v1530, %v1557
      %v1602 = vadd.f32 %v1531, %v1557
      %v1603 = vadd.f32 %v1532, %v1557
      %v1604 = vadd.f32 %v1533, %v1557
      %v1605 = vadd.f32 %v1534, %v1557
      %v1606 = vadd.f32 %v1535, %v1557
      %v1607 = vadd.f32 %v1536, %v1557
      %v1608 = vadd.f32 %v1537, %v1557
      %v1609 = vadd.f32 %v1538, %v1557
      %v1610 = vadd.f32 %v1539, %v1557
      %v1611 = vadd.f32 %v1540, %v1557
      %v1612 = vadd.f32 %v1541, %v1557
      %v1613 = vadd.f32 %v1542, %v1557
      %v1614 = vadd.f32 %v1543, %v1557
      %v1615 = vadd.f32 %v1544, %v1557
      %v1616 = vadd.f32 %v1545, %v1557
      %v1617 = vadd.f32 %v1546, %v1557
      %v1618 = vadd.f32 %v1547, %v1557
      %v1619 = vadd.f32 %v1548, %v1557
      %v1620 = vadd.f32 %v1549, %v1557
      %v1621 = vadd.f32 %v1550, %v1557
      %v1622 = vadd.f32 %v1551, %v1557
      %v1623 = vmax.f32 %v1559, 0.0
      %v1624 = vmax.f32 %v1560, 0.0
      %v1625 = vmax.f32 %v1561, 0.0
      %v1626 = vmax.f32 %v1562, 0.0
      %v1627 = vmax.f32 %v1563, 0.0
      %v1628 = vmax.f32 %v1564, 0.0
      %v1629 = vmax.f32 %v1565, 0.0
      %v1630 = vmax.f32 %v1566, 0.0
      %v1631 = vmax.f32 %v1567, 0.0
      %v1632 = vmax.f32 %v1568, 0.0
      %v1633 = vmax.f32 %v1569, 0.0
      %v1634 = vmax.f32 %v1570, 0.0
      %v1635 = vmax.f32 %v1571, 0.0
      %v1636 = vmax.f32 %v1572, 0.0
      %v1637 = vmax.f32 %v1573, 0.0
      %v1638 = vmax.f32 %v1574, 0.0
      %v1639 = vmax.f32 %v1575, 0.0
      %v1640 = vmax.f32 %v1576, 0.0
      %v1641 = vmax.f32 %v1577, 0.0
      %v1642 = vmax.f32 %v1578, 0.0
      %v1643 = vmax.f32 %v1579, 0.0
      %v1644 = vmax.f32 %v1580, 0.0
      %v1645 = vmax.f32 %v1581, 0.0
      %v1646 = vmax.f32 %v1582, 0.0
      %v1647 = vmax.f32 %v1583, 0.0
      %v1648 = vmax.f32 %v1584, 0.0
      %v1649 = vmax.f32 %v1585, 0.0
      %v1650 = vmax.f32 %v1586, 0.0
      %v1651 = vmax.f32 %v1587, 0.0
      %v1652 = vmax.f32 %v1588, 0.0
      %v1653 = vmax.f32 %v1589, 0.0
      %v1654 = vmax.f32 %v1590, 0.0
      %v1655 = vmax.f32 %v1591, 0.0
      %v1656 = vmax.f32 %v1592, 0.0
      %v1657 = vmax.f32 %v1593, 0.0
      %v1658 = vmax.f32 %v1594, 0.0
      %v1659 = vmax.f32 %v1595, 0.0
      %v1660 = vmax.f32 %v1596, 0.0
      %v1661 = vmax.f32 %v1597, 0.0
      %v1662 = vmax.f32 %v1598, 0.0
      %v1663 = vmax.f32 %v1599, 0.0
      %v1664 = vmax.f32 %v1600, 0.0
      %v1665 = vmax.f32 %v1601, 0.0
      %v1666 = vmax.f32 %v1602, 0.0
      %v1667 = vmax.f32 %v1603, 0.0
      %v1668 = vmax.f32 %v1604, 0.0
      %v1669 = vmax.f32 %v1605, 0.0
      %v1670 = vmax.f32 %v1606, 0.0
      %v1671 = vmax.f32 %v1607, 0.0
      %v1672 = vmax.f32 %v1608, 0.0
      %v1673 = vmax.f32 %v1609, 0.0
      %v1674 = vmax.f32 %v1610, 0.0
      %v1675 = vmax.f32 %v1611, 0.0
      %v1676 = vmax.f32 %v1612, 0.0
      %v1677 = vmax.f32 %v1613, 0.0
      %v1678 = vmax.f32 %v1614, 0.0
      %v1679 = vmax.f32 %v1615, 0.0
      %v1680 = vmax.f32 %v1616, 0.0
      %v1681 = vmax.f32 %v1617, 0.0
      %v1682 = vmax.f32 %v1618, 0.0
      %v1683 = vmax.f32 %v1619, 0.0
      %v1684 = vmax.f32 %v1620, 0.0
      %v1685 = vmax.f32 %v1621, 0.0
      %v1686 = vmax.f32 %v1622, 0.0
      %v1687 = vpack.c.bf16 %v1624, %v1623
      %v1688 = vpack.c.bf16 %v1626, %v1625
      %v1689 = vpack.c.bf16 %v1628, %v1627
      %v1690 = vpack.c.bf16 %v1630, %v1629
      %v1691 = vpack.c.bf16 %v1632, %v1631
      %v1692 = vpack.c.bf16 %v1634, %v1633
      %v1693 = vpack.c.bf16 %v1636, %v1635
      %v1694 = vpack.c.bf16 %v1638, %v1637
      %v1695 = vpack.c.bf16 %v1640, %v1639
      %v1696 = vpack.c.bf16 %v1642, %v1641
      %v1697 = vpack.c.bf16 %v1644, %v1643
      %v1698 = vpack.c.bf16 %v1646, %v1645
      %v1699 = vpack.c.bf16 %v1648, %v1647
      %v1700 = vpack.c.bf16 %v1650, %v1649
      %v1701 = vpack.c.bf16 %v1652, %v1651
      %v1702 = vpack.c.bf16 %v1654, %v1653
      %v1703 = vpack.c.bf16 %v1656, %v1655
      %v1704 = vpack.c.bf16 %v1658, %v1657
      %v1705 = vpack.c.bf16 %v1660, %v1659
      %v1706 = vpack.c.bf16 %v1662, %v1661
      %v1707 = vpack.c.bf16 %v1664, %v1663
      %v1708 = vpack.c.bf16 %v1666, %v1665
      %v1709 = vpack.c.bf16 %v1668, %v1667
      %v1710 = vpack.c.bf16 %v1670, %v1669
      %v1711 = vpack.c.bf16 %v1672, %v1671
      %v1712 = vpack.c.bf16 %v1674, %v1673
      %v1713 = vpack.c.bf16 %v1676, %v1675
      %v1714 = vpack.c.bf16 %v1678, %v1677
      %v1715 = vpack.c.bf16 %v1680, %v1679
      %v1716 = vpack.c.bf16 %v1682, %v1681
      %v1717 = vpack.c.bf16 %v1684, %v1683
      %v1718 = vpack.c.bf16 %v1686, %v1685
      %v1751 = vunpack.c.l.b16 %v1687
      %v1752 = vunpack.c.h.b16 %v1687
      %v1753 = vunpack.c.l.b16 %v1688
      %v1754 = vunpack.c.h.b16 %v1688
      %v1755 = vunpack.c.l.b16 %v1689
      %v1756 = vunpack.c.h.b16 %v1689
      %v1757 = vunpack.c.l.b16 %v1690
      %v1758 = vunpack.c.h.b16 %v1690
      %v1759 = vunpack.c.l.b16 %v1691
      %v1760 = vunpack.c.h.b16 %v1691
      %v1761 = vunpack.c.l.b16 %v1692
      %v1762 = vunpack.c.h.b16 %v1692
      %v1763 = vunpack.c.l.b16 %v1693
      %v1764 = vunpack.c.h.b16 %v1693
      %v1765 = vunpack.c.l.b16 %v1694
      %v1766 = vunpack.c.h.b16 %v1694
      %v1767 = vunpack.c.l.b16 %v1695
      %v1768 = vunpack.c.h.b16 %v1695
      %v1769 = vunpack.c.l.b16 %v1696
      %v1770 = vunpack.c.h.b16 %v1696
      %v1771 = vunpack.c.l.b16 %v1697
      %v1772 = vunpack.c.h.b16 %v1697
      %v1773 = vunpack.c.l.b16 %v1698
      %v1774 = vunpack.c.h.b16 %v1698
      %v1775 = vunpack.c.l.b16 %v1699
      %v1776 = vunpack.c.h.b16 %v1699
      %v1777 = vunpack.c.l.b16 %v1700
      %v1778 = vunpack.c.h.b16 %v1700
      %v1779 = vunpack.c.l.b16 %v1701
      %v1780 = vunpack.c.h.b16 %v1701
      %v1781 = vunpack.c.l.b16 %v1702
      %v1782 = vunpack.c.h.b16 %v1702
      %v1783 = vunpack.c.l.b16 %v1703
      %v1784 = vunpack.c.h.b16 %v1703
      %v1785 = vunpack.c.l.b16 %v1704
      %v1786 = vunpack.c.h.b16 %v1704
      %v1787 = vunpack.c.l.b16 %v1705
      %v1788 = vunpack.c.h.b16 %v1705
      %v1789 = vunpack.c.l.b16 %v1706
      %v1790 = vunpack.c.h.b16 %v1706
      %v1791 = vunpack.c.l.b16 %v1707
      %v1792 = vunpack.c.h.b16 %v1707
      %v1793 = vunpack.c.l.b16 %v1708
      %v1794 = vunpack.c.h.b16 %v1708
      %v1795 = vunpack.c.l.b16 %v1709
      %v1796 = vunpack.c.h.b16 %v1709
      %v1797 = vunpack.c.l.b16 %v1710
      %v1798 = vunpack.c.h.b16 %v1710
      %v1799 = vunpack.c.l.b16 %v1711
      %v1800 = vunpack.c.h.b16 %v1711
      %v1801 = vunpack.c.l.b16 %v1712
      %v1802 = vunpack.c.h.b16 %v1712
      %v1803 = vunpack.c.l.b16 %v1713
      %v1804 = vunpack.c.h.b16 %v1713
      %v1805 = vunpack.c.l.b16 %v1714
      %v1806 = vunpack.c.h.b16 %v1714
      %v1807 = vunpack.c.l.b16 %v1715
      %v1808 = vunpack.c.h.b16 %v1715
      %v1809 = vunpack.c.l.b16 %v1716
      %v1810 = vunpack.c.h.b16 %v1716
      %v1811 = vunpack.c.l.b16 %v1717
      %v1812 = vunpack.c.h.b16 %v1717
      %v1813 = vunpack.c.l.b16 %v1718
      %v1814 = vunpack.c.h.b16 %v1718
      %v1815 = vpack.c.b16 %v1751, %v1751
      %v1816 = vpack.c.b16 %v1752, %v1752
      %v1817 = vpack.c.b16 %v1753, %v1753
      %v1818 = vpack.c.b16 %v1754, %v1754
      %v1819 = vpack.c.b16 %v1755, %v1755
      %v1820 = vpack.c.b16 %v1756, %v1756
      %v1821 = vpack.c.b16 %v1757, %v1757
      %v1822 = vpack.c.b16 %v1758, %v1758
      %v1823 = vpack.c.b16 %v1759, %v1759
      %v1824 = vpack.c.b16 %v1760, %v1760
      %v1825 = vpack.c.b16 %v1761, %v1761
      %v1826 = vpack.c.b16 %v1762, %v1762
      %v1827 = vpack.c.b16 %v1763, %v1763
      %v1828 = vpack.c.b16 %v1764, %v1764
      %v1829 = vpack.c.b16 %v1765, %v1765
      %v1830 = vpack.c.b16 %v1766, %v1766
      %v1831 = vpack.c.b16 %v1767, %v1767
      %v1832 = vpack.c.b16 %v1768, %v1768
      %v1833 = vpack.c.b16 %v1769, %v1769
      %v1834 = vpack.c.b16 %v1770, %v1770
      %v1835 = vpack.c.b16 %v1771, %v1771
      %v1836 = vpack.c.b16 %v1772, %v1772
      %v1837 = vpack.c.b16 %v1773, %v1773
      %v1838 = vpack.c.b16 %v1774, %v1774
      %v1839 = vpack.c.b16 %v1775, %v1775
      %v1840 = vpack.c.b16 %v1776, %v1776
      %v1841 = vpack.c.b16 %v1777, %v1777
      %v1842 = vpack.c.b16 %v1778, %v1778
      %v1843 = vpack.c.b16 %v1779, %v1779
      %v1844 = vpack.c.b16 %v1780, %v1780
      %v1845 = vpack.c.b16 %v1781, %v1781
      %v1846 = vpack.c.b16 %v1782, %v1782
      %v1847 = vpack.c.b16 %v1783, %v1783
      %v1848 = vpack.c.b16 %v1784, %v1784
      %v1849 = vpack.c.b16 %v1785, %v1785
      %v1850 = vpack.c.b16 %v1786, %v1786
      %v1851 = vpack.c.b16 %v1787, %v1787
      %v1852 = vpack.c.b16 %v1788, %v1788
      %v1853 = vpack.c.b16 %v1789, %v1789
      %v1854 = vpack.c.b16 %v1790, %v1790
      %v1855 = vpack.c.b16 %v1791, %v1791
      %v1856 = vpack.c.b16 %v1792, %v1792
      %v1857 = vpack.c.b16 %v1793, %v1793
      %v1858 = vpack.c.b16 %v1794, %v1794
      %v1859 = vpack.c.b16 %v1795, %v1795
      %v1860 = vpack.c.b16 %v1796, %v1796
      %v1861 = vpack.c.b16 %v1797, %v1797
      %v1862 = vpack.c.b16 %v1798, %v1798
      %v1863 = vpack.c.b16 %v1799, %v1799
      %v1864 = vpack.c.b16 %v1800, %v1800
      %v1865 = vpack.c.b16 %v1801, %v1801
      %v1866 = vpack.c.b16 %v1802, %v1802
      %v1867 = vpack.c.b16 %v1803, %v1803
      %v1868 = vpack.c.b16 %v1804, %v1804
      %v1869 = vpack.c.b16 %v1805, %v1805
      %v1870 = vpack.c.b16 %v1806, %v1806
      %v1871 = vpack.c.b16 %v1807, %v1807
      %v1872 = vpack.c.b16 %v1808, %v1808
      %v1873 = vpack.c.b16 %v1809, %v1809
      %v1874 = vpack.c.b16 %v1810, %v1810
      %v1875 = vpack.c.b16 %v1811, %v1811
      %v1876 = vpack.c.b16 %v1812, %v1812
      %v1877 = vpack.c.b16 %v1813, %v1813
      %v1878 = vpack.c.b16 %v1814, %v1814
      %1943 = vst [vmem:[#allocation3] sm:$0xf] %v1815
      %1944 = vst [vmem:[#allocation3 + $0x4] sm:$0xf] %v1816
      %1945 = vst [vmem:[#allocation3 + $0x8] sm:$0xf] %v1817
      %1946 = vst [vmem:[#allocation3 + $0xc] sm:$0xf] %v1818
      %1947 = vst [vmem:[#allocation3 + $0x10] sm:$0xf] %v1819
      %1948 = vst [vmem:[#allocation3 + $0x14] sm:$0xf] %v1820
      %1949 = vst [vmem:[#allocation3 + $0x18] sm:$0xf] %v1821
      %1950 = vst [vmem:[#allocation3 + $0x1c] sm:$0xf] %v1822
      %1951 = vst [vmem:[#allocation3 + $0x20] sm:$0xf] %v1823
      %1952 = vst [vmem:[#allocation3 + $0x24] sm:$0xf] %v1824
      %1953 = vst [vmem:[#allocation3 + $0x28] sm:$0xf] %v1825
      %1954 = vst [vmem:[#allocation3 + $0x2c] sm:$0xf] %v1826
      %1955 = vst [vmem:[#allocation3 + $0x30] sm:$0xf] %v1827
      %1956 = vst [vmem:[#allocation3 + $0x34] sm:$0xf] %v1828
      %1957 = vst [vmem:[#allocation3 + $0x38] sm:$0xf] %v1829
      %1958 = vst [vmem:[#allocation3 + $0x3c] sm:$0xf] %v1830
      %1959 = vst [vmem:[#allocation3 + $0x40] sm:$0xf] %v1831
      %1960 = vst [vmem:[#allocation3 + $0x44] sm:$0xf] %v1832
      %1961 = vst [vmem:[#allocation3 + $0x48] sm:$0xf] %v1833
      %1962 = vst [vmem:[#allocation3 + $0x4c] sm:$0xf] %v1834
      %1963 = vst [vmem:[#allocation3 + $0x50] sm:$0xf] %v1835
      %1964 = vst [vmem:[#allocation3 + $0x54] sm:$0xf] %v1836
      %1965 = vst [vmem:[#allocation3 + $0x58] sm:$0xf] %v1837
      %1966 = vst [vmem:[#allocation3 + $0x5c] sm:$0xf] %v1838
      %1967 = vst [vmem:[#allocation3 + $0x60] sm:$0xf] %v1839
      %1968 = vst [vmem:[#allocation3 + $0x64] sm:$0xf] %v1840
      %1969 = vst [vmem:[#allocation3 + $0x68] sm:$0xf] %v1841
      %1970 = vst [vmem:[#allocation3 + $0x6c] sm:$0xf] %v1842
      %1971 = vst [vmem:[#allocation3 + $0x70] sm:$0xf] %v1843
      %1972 = vst [vmem:[#allocation3 + $0x74] sm:$0xf] %v1844
      %1973 = vst [vmem:[#allocation3 + $0x78] sm:$0xf] %v1845
      %1974 = vst [vmem:[#allocation3 + $0x7c] sm:$0xf] %v1846
      %1975 = vst [vmem:[#allocation3 + $0x80] sm:$0xf] %v1847
      %1976 = vst [vmem:[#allocation3 + $0x84] sm:$0xf] %v1848
      %1977 = vst [vmem:[#allocation3 + $0x88] sm:$0xf] %v1849
      %1978 = vst [vmem:[#allocation3 + $0x8c] sm:$0xf] %v1850
      %1979 = vst [vmem:[#allocation3 + $0x90] sm:$0xf] %v1851
      %1980 = vst [vmem:[#allocation3 + $0x94] sm:$0xf] %v1852
      %1981 = vst [vmem:[#allocation3 + $0x98] sm:$0xf] %v1853
      %1982 = vst [vmem:[#allocation3 + $0x9c] sm:$0xf] %v1854
      %1983 = vst [vmem:[#allocation3 + $0xa0] sm:$0xf] %v1855
      %1984 = vst [vmem:[#allocation3 + $0xa4] sm:$0xf] %v1856
      %1985 = vst [vmem:[#allocation3 + $0xa8] sm:$0xf] %v1857
      %1986 = vst [vmem:[#allocation3 + $0xac] sm:$0xf] %v1858
      %1987 = vst [vmem:[#allocation3 + $0xb0] sm:$0xf] %v1859
      %1988 = vst [vmem:[#allocation3 + $0xb4] sm:$0xf] %v1860
      %1989 = vst [vmem:[#allocation3 + $0xb8] sm:$0xf] %v1861
      %1990 = vst [vmem:[#allocation3 + $0xbc] sm:$0xf] %v1862
      %1991 = vst [vmem:[#allocation3 + $0xc0] sm:$0xf] %v1863
      %1992 = vst [vmem:[#allocation3 + $0xc4] sm:$0xf] %v1864
      %1993 = vst [vmem:[#allocation3 + $0xc8] sm:$0xf] %v1865
      %1994 = vst [vmem:[#allocation3 + $0xcc] sm:$0xf] %v1866
      %1995 = vst [vmem:[#allocation3 + $0xd0] sm:$0xf] %v1867
      %1996 = vst [vmem:[#allocation3 + $0xd4] sm:$0xf] %v1868
      %1997 = vst [vmem:[#allocation3 + $0xd8] sm:$0xf] %v1869
      %1998 = vst [vmem:[#allocation3 + $0xdc] sm:$0xf] %v1870
      %1999 = vst [vmem:[#allocation3 + $0xe0] sm:$0xf] %v1871
      %2000 = vst [vmem:[#allocation3 + $0xe4] sm:$0xf] %v1872
      %2001 = vst [vmem:[#allocation3 + $0xe8] sm:$0xf] %v1873
      %2002 = vst [vmem:[#allocation3 + $0xec] sm:$0xf] %v1874
      %2003 = vst [vmem:[#allocation3 + $0xf0] sm:$0xf] %v1875
      %2004 = vst [vmem:[#allocation3 + $0xf4] sm:$0xf] %v1876
      %2005 = vst [vmem:[#allocation3 + $0xf8] sm:$0xf] %v1877
      %2006 = vst [vmem:[#allocation3 + $0xfc] sm:$0xf] %v1878
    $region25: #{f.1} parent=1 // pred_fallthru
      _
    // Predicated region
    $region26: #{f.1} parent=1 // pred_check
      _
    $region27: #{f.1} parent=1 // pred_check_branch
      %2008 = sbr.rel (0) target = $region29
    $region28: #{f.1} parent=1 // pred_region
      %s2010 = ssub.s32 4096, 4096
      %2011 = vsyncadd [#allocation4], %s2010
      %s2012 = sshll.u32 [#allocation3], 4
      %s2013 = int_to_ptr.vmem [resolvable:$true] %s2012
      %2018 = dma.vmem_to_hbm [thread:$0]  %s2013, 4096, %s4, [#allocation4], 64, 64, 4
    $region29: #{f.1} parent=1 // pred_fallthru
      _
    // Predicated region
    $region30: #{f.1} parent=1 // pred_check
      _
    $region31: #{f.1} parent=1 // pred_check_branch
      %2020 = sbr.rel (0) target = $region33
    $region32: #{f.1} parent=1 // pred_region
      %2021 = dma.done [#allocation4], 4096
    $region33: #{f.1} parent=1 // pred_fallthru
      _
    %2022 = vsyncpa [#allocation4], 1

</llo_original>
